<compile_context>
chip_gen: v5e
topology: v5e:2x2
jax: 0.10.0
libtpu: 0.0.40
codegen_flags: <defaults>
</compile_context>

<pallas_src>
import functools

import jax
import jax.numpy as jnp
from jax import lax
from jax.experimental import pallas as pl
from jax.experimental.pallas import tpu as pltpu


def make_kernel(num_layers, T, B_tile, D_in, H, out_size, compute_dtype):
    """Kernel body: stacked LSTM + MLP head for one batch tile."""

    def kernel(*refs):
        # ---- unpack refs -------------------------------------------------
        idx = 0
        x_ref = refs[idx]; idx += 1                       # (1, T*B_tile, D_in) bf16
        lstm = []
        for _ in range(num_layers):
            # w_ih_t: (D_l, 4H), w_hh_t: (H, 4H), b: (1, 4H)  (gate-prescaled)
            lstm.append((refs[idx], refs[idx + 1], refs[idx + 2]))
            idx += 3
        fc1_wa, fc1_wb, fc1_b, fc2_wt, fc2_b = refs[idx:idx + 5]
        idx += 5
        out_ref = refs[idx]; idx += 1                     # (B_tile, out_size) f32
        gates_buf, seq_buf = refs[idx:idx + 2]

        # Time-major flat rows: row = t * B_tile + b (prepared by wrapper).
        x_flat = x_ref[0]                                 # (T*B_tile, D_in)

        def run_layer(w_ih_ref, w_hh_ref, b_ref, is_first, is_last):
            # ---- hoisted input-to-hidden projection + bias: ONE matmul ----
            src = x_flat if is_first else seq_buf[...]
            gates_buf[...] = (
                jnp.dot(src, w_ih_ref[...], preferred_element_type=jnp.float32)
                + b_ref[...])

            w_hh = w_hh_ref[...]          # (H, 4H) bf16, held across all T steps
            # TODO(synk): weight-stationary MXU (pltpu.matmul_push_rhs /
            # matmul_acc_lhs / matmul_pop) would avoid re-loading W_hh on
            # every serial step; kept jnp.dot for lowering portability.

            def step(t, carry):
                h_bf, c = carry           # h_bf: (B_tile,H) bf16, c: f32
                row = t * B_tile
                if not isinstance(row, int):
                    row = pl.multiple_of(row, B_tile)
                # Only the recurrent matmul sits on the serial path.
                g = gates_buf[pl.ds(row, B_tile), :] + jnp.dot(
                    h_bf, w_hh, preferred_element_type=jnp.float32)
                # Gate rows i/f/o were pre-scaled by 0.5, g-gate by 1.0, so a
                # SINGLE full-width tanh gives all four gates:
                #   sigmoid(z) = 0.5*tanh(0.5*z) + 0.5   (i, f, o)
                #   tanh(z)                               (g)
                th = jnp.tanh(g)              # one (B_tile, 4H) EUP push
                sg = 0.5 * th + 0.5           # full-width VALU fma
                i_g = sg[:, 0 * H:1 * H]
                f_g = sg[:, 1 * H:2 * H]
                g_g = th[:, 2 * H:3 * H]
                o_g = sg[:, 3 * H:4 * H]
                c_new = f_g * c + i_g * g_g
                h_new = o_g * jnp.tanh(c_new)
                h_bf_new = h_new.astype(compute_dtype)   # cast once, reuse
                if not is_last:           # last layer's sequence is never read
                    seq_buf[pl.ds(row, B_tile), :] = h_bf_new
                return h_bf_new, c_new

            carry = (jnp.zeros((B_tile, H), compute_dtype),
                     jnp.zeros((B_tile, H), jnp.float32))
            if T <= 8:
                # Small T: full static unroll is spill-safe and gives the LLO
                # scheduler full visibility.
                for t in range(T):
                    carry = step(t, carry)
            else:
                # Bounded unroll keeps live ranges under the 64-vreg file.
                carry = lax.fori_loop(0, T, step, carry, unroll=8)
            return carry[0]               # final hidden state (bf16)

        # ---- stacked LSTM ------------------------------------------------
        h_finals = []
        for layer in range(num_layers):
            w_ih_t, w_hh_t, b = lstm[layer]
            h_finals.append(run_layer(w_ih_t, w_hh_t, b,
                                      layer == 0, layer == num_layers - 1))

        # ---- head: fc2(fc1(concat(h[-2], h[-1]))), eval dropout = identity
        h_a = h_finals[-2]
        h_b = h_finals[-1]
        z = (jnp.dot(h_a, fc1_wa[...], preferred_element_type=jnp.float32)
             + jnp.dot(h_b, fc1_wb[...], preferred_element_type=jnp.float32)
             + fc1_b[...])
        out = (jnp.dot(z.astype(compute_dtype), fc2_wt[...],
                       preferred_element_type=jnp.float32) + fc2_b[...])
        out_ref[...] = out.astype(out_ref.dtype)

    return kernel


def recurrent_classifier_forward(x_ids, params, *, num_layers, hidden_size,
                                 output_size, compute_dtype=jnp.bfloat16):
    """JAX wrapper: embedding gather + layout plumbing + pallas_call."""
    assert num_layers >= 2, "concat(hidden[-2], hidden[-1]) needs num_layers >= 2"
    H = hidden_size
    f32 = jnp.float32
    cdt = compute_dtype
    cdt_size = jnp.dtype(cdt).itemsize

    emb = params["embedding"]                        # (V, D_in)
    x_emb = jnp.take(emb, x_ids, axis=0)             # (B, T, D_in)  gather glue
    B, T, D_in = x_emb.shape

    # --- batch padding / tiling against a v7x-safe VMEM budget -------------
    B_pad = ((B + 7) // 8) * 8

    weight_bytes = 0
    for l in range(num_layers):
        d_l = D_in if l == 0 else H
        weight_bytes += (d_l * 4 * H + H * 4 * H) * cdt_size + 4 * H * 4
    weight_bytes += (2 * H * H * cdt_size + H * 4
                     + H * output_size * cdt_size + output_size * 4)

    def est_bytes(bt):
        x_blk = 2 * T * bt * D_in * cdt_size          # double-buffered x block
        out_blk = 2 * bt * output_size * 4            # double-buffered out block
        scratch = T * bt * 4 * H * 4 + T * bt * H * cdt_size
        return x_blk + out_blk + scratch + weight_bytes   # weights counted once

    budget = 20 * 1024 * 1024                         # headroom under scoped cap
    cands = [c for c in (256, 128, 64, 32, 16, 8) if B_pad % c == 0]
    # Prefer >= 2 grid tiles so ("parallel",) can shard across TensorCores
    # (v7x) and pipeline HBM traffic; fall back to a single tile if B is tiny.
    pref = [c for c in cands if B_pad // c >= 2] or cands
    B_tile = next((c for c in pref if est_bytes(c) <= budget),
                  next((c for c in cands if est_bytes(c) <= budget), 8))
    n_tiles = B_pad // B_tile

    # Wrapper-side layout plumbing only: pad batch, time-major inside each
    # batch tile, flatten to (n_tiles, T*B_tile, D_in) -> row = t*B_tile + b.
    x_p = jnp.pad(x_emb, ((0, B_pad - B), (0, 0), (0, 0)))
    x_tiles = (x_p.reshape(n_tiles, B_tile, T, D_in)
               .transpose(0, 2, 1, 3)
               .reshape(n_tiles, T * B_tile, D_in)
               .astype(cdt))

    # Gate pre-scale (exact *0.5 for i/f/o, *1 for g) enabling the in-kernel
    # sigmoid-via-tanh identity at full vreg width.
    gate_scale = jnp.concatenate([
        jnp.full((H,), 0.5, f32), jnp.full((H,), 0.5, f32),
        jnp.ones((H,), f32), jnp.full((H,), 0.5, f32)])

    # --- inputs + specs -----------------------------------------------------
    inputs = [x_tiles]
    in_specs = [pl.BlockSpec((1, T * B_tile, D_in), lambda i: (i, 0, 0))]

    def _full(a):
        return pl.BlockSpec(a.shape, lambda i, _nd=a.ndim: (0,) * _nd)

    for l in range(num_layers):
        w_ih = params[f"w_ih_{l}"] * gate_scale[:, None]   # (4H, D_l) f32
        w_hh = params[f"w_hh_{l}"] * gate_scale[:, None]   # (4H, H)  f32
        b = params[f"b_{l}"] * gate_scale[None, :]         # (1, 4H)
        inputs += [w_ih.T.astype(cdt),                     # (D_l, 4H)
                   w_hh.T.astype(cdt),                     # (H, 4H)
                   b.astype(f32)]                          # (1, 4H)
    fc1_wt = params["fc1_w"].T                             # (2H, H)
    inputs += [
        fc1_wt[:H, :].astype(cdt),                         # multiplies h[-2]
        fc1_wt[H:, :].astype(cdt),                         # multiplies h[-1]
        params["fc1_b"].astype(f32),                       # (1, H)
        params["fc2_w"].T.astype(cdt),                     # (H, O)
        params["fc2_b"].astype(f32),                       # (1, O)
    ]
    in_specs += [_full(a) for a in inputs[1:]]

    scratch = [
        pltpu.VMEM((T * B_tile, 4 * H), f32),              # hoisted gate pre-acts
        pltpu.VMEM((T * B_tile, H), cdt),                  # inter-layer sequence
    ]

    est = est_bytes(B_tile)
    vmem_limit = int(min(max(2 * est, 16 * 1024 * 1024), 30 * 1024 * 1024))

    kernel = make_kernel(num_layers, T, B_tile, D_in, H, output_size, cdt)

    out_pad = pl.pallas_call(
        kernel,
        out_shape=jax.ShapeDtypeStruct((B_pad, output_size), f32),
        grid_spec=pltpu.PrefetchScalarGridSpec(
            num_scalar_prefetch=0,
            grid=(n_tiles,),
            in_specs=in_specs,
            out_specs=pl.BlockSpec((B_tile, output_size), lambda i: (i, 0)),
            scratch_shapes=scratch,
        ),
        compiler_params=pltpu.CompilerParams(
            dimension_semantics=("parallel",),
            vmem_limit_bytes=vmem_limit,
        ),
    )(*inputs)
    return out_pad[:B]


def init_params(key, *, embedding_dim, input_size, hidden_size, output_size,
                num_layers):
    """PyTorch-style init (uniform(-1/sqrt(fan_in), 1/sqrt(fan_in)))."""
    H = hidden_size
    keys = jax.random.split(key, 6 + 4 * num_layers)
    k = 0
    params = {}
    params["embedding"] = jax.random.normal(
        keys[k], (embedding_dim, input_size), jnp.float32); k += 1
    s = 1.0 / jnp.sqrt(H)
    for l in range(num_layers):
        d_l = input_size if l == 0 else H
        params[f"w_ih_{l}"] = jax.random.uniform(
            keys[k], (4 * H, d_l), jnp.float32, -s, s); k += 1
        params[f"w_hh_{l}"] = jax.random.uniform(
            keys[k], (4 * H, H), jnp.float32, -s, s); k += 1
        b_ih = jax.random.uniform(keys[k], (4 * H,), jnp.float32, -s, s); k += 1
        b_hh = jax.random.uniform(keys[k], (4 * H,), jnp.float32, -s, s); k += 1
        params[f"b_{l}"] = (b_ih + b_hh).reshape(1, 4 * H)
    s1 = 1.0 / jnp.sqrt(2 * H)
    params["fc1_w"] = jax.random.uniform(
        keys[k], (H, 2 * H), jnp.float32, -s1, s1); k += 1
    params["fc1_b"] = jax.random.uniform(
        keys[k], (1, H), jnp.float32, -s1, s1); k += 1
    s2 = 1.0 / jnp.sqrt(H)
    params["fc2_w"] = jax.random.uniform(
        keys[k], (output_size, H), jnp.float32, -s2, s2); k += 1
    params["fc2_b"] = jax.random.uniform(
        keys[k], (1, output_size), jnp.float32, -s2, s2); k += 1
    return params


def ref_forward(x_ids, params, *, num_layers, hidden_size, output_size,
                quantize_dtype=None):
    """Pure-JAX reference (eval-mode dropout = identity).

    If quantize_dtype is set, weights / inputs / inter-layer activations are
    round-tripped through it to mirror the kernel's storage precision.
    """
    H = hidden_size

    def q(a):
        if quantize_dtype is None:
            return a
        return a.astype(quantize_dtype).astype(jnp.float32)

    layer_in = q(params["embedding"][x_ids])         # (B, T, D)
    B, T, _ = layer_in.shape
    h_fin = []
    for l in range(num_layers):
        w_ih = q(params[f"w_ih_{l}"])
        w_hh = q(params[f"w_hh_{l}"])
        b = params[f"b_{l}"][0]
        h = jnp.zeros((B, H), jnp.float32)
        c = jnp.zeros((B, H), jnp.float32)
        outs = []
        for t in range(T):
            x_t = layer_in[:, t, :]
            gates = x_t @ w_ih.T + h @ w_hh.T + b
            i_g = jax.nn.sigmoid(gates[:, :H])
            f_g = jax.nn.sigmoid(gates[:, H:2 * H])
            g_g = jnp.tanh(gates[:, 2 * H:3 * H])
            o_g = jax.nn.sigmoid(gates[:, 3 * H:])
            c = f_g * c + i_g * g_g
            h = o_g * jnp.tanh(c)
            outs.append(h)
        layer_in = q(jnp.stack(outs, axis=1))
        h_fin.append(h)
    hid = jnp.concatenate([h_fin[-2], h_fin[-1]], axis=1)
    z = hid @ q(params["fc1_w"]).T + params["fc1_b"][0]
    return z @ q(params["fc2_w"]).T + params["fc2_b"][0]


if __name__ == "__main__":
    # Small, forward-consistent shapes.
    embedding_dim = 50      # vocab size
    input_size = 32         # embedding feature dim
    hidden_size = 32
    output_size = 8
    num_layers = 2
    B, T = 2, 8

    key = jax.random.PRNGKey(0)
    pkey, xkey = jax.random.split(key)
    params = init_params(
        pkey, embedding_dim=embedding_dim, input_size=input_size,
        hidden_size=hidden_size, output_size=output_size,
        num_layers=num_layers)
    x_ids = jax.random.randint(xkey, (B, T), 0, embedding_dim, dtype=jnp.int32)

    fwd = jax.jit(functools.partial(
        recurrent_classifier_forward, num_layers=num_layers,
        hidden_size=hidden_size, output_size=output_size))
    out = jax.block_until_ready(fwd(x_ids, params))

    ref = ref_forward(x_ids, params, num_layers=num_layers,
                      hidden_size=hidden_size, output_size=output_size,
                      quantize_dtype=jnp.bfloat16)
    assert out.shape == (B, output_size), out.shape
    assert jnp.all(jnp.isfinite(out))
    max_err = float(jnp.max(jnp.abs(out - ref)))
    assert jnp.allclose(out, ref, atol=3e-2, rtol=3e-2), max_err

    print("KERNEL_OK")
</pallas_src>

<mosaic_0001>
module attributes {stable_mosaic.version = 11 : i64} {
  func.func @kernel(%arg0: i32, %arg1: memref<1x64x32xbf16, #tpu.memory_space<vmem>>, %arg2: memref<32x128xbf16, #tpu.memory_space<vmem>>, %arg3: memref<32x128xbf16, #tpu.memory_space<vmem>>, %arg4: memref<1x128xf32, #tpu.memory_space<vmem>>, %arg5: memref<32x128xbf16, #tpu.memory_space<vmem>>, %arg6: memref<32x128xbf16, #tpu.memory_space<vmem>>, %arg7: memref<1x128xf32, #tpu.memory_space<vmem>>, %arg8: memref<32x32xbf16, #tpu.memory_space<vmem>>, %arg9: memref<32x32xbf16, #tpu.memory_space<vmem>>, %arg10: memref<1x32xf32, #tpu.memory_space<vmem>>, %arg11: memref<32x8xbf16, #tpu.memory_space<vmem>>, %arg12: memref<1x8xf32, #tpu.memory_space<vmem>>, %arg13: memref<8x8xf32, #tpu.memory_space<vmem>>, %arg14: memref<64x128xf32, #tpu.memory_space<vmem>>, %arg15: memref<64x32xbf16, #tpu.memory_space<vmem>>) attributes {dimension_semantics = [#tpu.dimension_semantics<parallel>], iteration_bounds = array<i64: 1>, scalar_prefetch = 0 : i64, scratch_operands = 2 : i64, tpu.core_type = #tpu.core_type<tc>, window_params = [{transform_indices = @transform_0, window_bounds = array<i64: 1, 64, 32>}, {pipeline_mode = #tpu.pipeline_mode<synchronous>, transform_indices = @transform_1, window_bounds = array<i64: 32, 128>}, {pipeline_mode = #tpu.pipeline_mode<synchronous>, transform_indices = @transform_2, window_bounds = array<i64: 32, 128>}, {pipeline_mode = #tpu.pipeline_mode<synchronous>, transform_indices = @transform_3, window_bounds = array<i64: 1, 128>}, {pipeline_mode = #tpu.pipeline_mode<synchronous>, transform_indices = @transform_4, window_bounds = array<i64: 32, 128>}, {pipeline_mode = #tpu.pipeline_mode<synchronous>, transform_indices = @transform_5, window_bounds = array<i64: 32, 128>}, {pipeline_mode = #tpu.pipeline_mode<synchronous>, transform_indices = @transform_6, window_bounds = array<i64: 1, 128>}, {pipeline_mode = #tpu.pipeline_mode<synchronous>, transform_indices = @transform_7, window_bounds = array<i64: 32, 32>}, {pipeline_mode = #tpu.pipeline_mode<synchronous>, transform_indices = @transform_8, window_bounds = array<i64: 32, 32>}, {pipeline_mode = #tpu.pipeline_mode<synchronous>, transform_indices = @transform_9, window_bounds = array<i64: 1, 32>}, {pipeline_mode = #tpu.pipeline_mode<synchronous>, transform_indices = @transform_10, window_bounds = array<i64: 32, 8>}, {pipeline_mode = #tpu.pipeline_mode<synchronous>, transform_indices = @transform_11, window_bounds = array<i64: 1, 8>}, {transform_indices = @transform_12, window_bounds = array<i64: 8, 8>}]} {
    %c0 = arith.constant 0 : index
    %c0_0 = arith.constant 0 : index
    %c0_1 = arith.constant 0 : index
    %0 = vector.load %arg1[%c0, %c0_0, %c0_1] : memref<1x64x32xbf16, #tpu.memory_space<vmem>>, vector<1x64x32xbf16>
    %1 = vector.shape_cast %0 : vector<1x64x32xbf16> to vector<64x32xbf16>
    %c0_2 = arith.constant 0 : index
    %c0_3 = arith.constant 0 : index
    %2 = vector.load %arg2[%c0_2, %c0_3] : memref<32x128xbf16, #tpu.memory_space<vmem>>, vector<32x128xbf16>
    %cst = arith.constant dense<0.000000e+00> : vector<64x128xf32>
    %3 = tpu.matmul %1, %2, %cst {dimension_numbers = #tpu.dot_dimension_numbers<[1], [0], [0], [1], [0, 0, 1, 1], [], []>} : vector<64x32xbf16>, vector<32x128xbf16>, vector<64x128xf32> -> vector<64x128xf32>
    %c0_4 = arith.constant 0 : index
    %c0_5 = arith.constant 0 : index
    %4 = vector.load %arg4[%c0_4, %c0_5] : memref<1x128xf32, #tpu.memory_space<vmem>>, vector<1x128xf32>
    %5 = vector.broadcast %4 : vector<1x128xf32> to vector<64x128xf32>
    %6 = arith.addf %3, %5 : vector<64x128xf32>
    %c0_6 = arith.constant 0 : index
    %c0_7 = arith.constant 0 : index
    %7 = vector.load %arg14[%c0_6, %c0_7] : memref<64x128xf32, #tpu.memory_space<vmem>>, vector<64x128xf32>
    tpu.vector_store %arg14[%c0_6, %c0_7], %6 {strides = array<i32>} : memref<64x128xf32, #tpu.memory_space<vmem>>, vector<64x128xf32>,
    %c0_8 = arith.constant 0 : index
    %c0_9 = arith.constant 0 : index
    %8 = vector.load %arg3[%c0_8, %c0_9] : memref<32x128xbf16, #tpu.memory_space<vmem>>, vector<32x128xbf16>
    %cst_10 = arith.constant 0.000000e+00 : bf16
    %9 = vector.broadcast %cst_10 : bf16 to vector<8x32xbf16>
    %cst_11 = arith.constant 0.000000e+00 : f32
    %10 = vector.broadcast %cst_11 : f32 to vector<8x32xf32>
    %c0_12 = arith.constant 0 : index
    %c0_13 = arith.constant 0 : index
    %11 = vector.load %arg14[%c0_12, %c0_13] : memref<64x128xf32, #tpu.memory_space<vmem>>, vector<8x128xf32>
    %cst_14 = arith.constant dense<0.000000e+00> : vector<8x128xf32>
    %12 = tpu.matmul %9, %8, %cst_14 {dimension_numbers = #tpu.dot_dimension_numbers<[1], [0], [0], [1], [0, 0, 1, 1], [], []>} : vector<8x32xbf16>, vector<32x128xbf16>, vector<8x128xf32> -> vector<8x128xf32>
    %13 = arith.addf %11, %12 : vector<8x128xf32>
    %14 = math.tanh %13 : vector<8x128xf32>
    %cst_15 = arith.constant 5.000000e-01 : f32
    %15 = vector.broadcast %cst_15 : f32 to vector<8x128xf32>
    %16 = arith.mulf %15, %14 : vector<8x128xf32>
    %cst_16 = arith.constant 5.000000e-01 : f32
    %17 = vector.broadcast %cst_16 : f32 to vector<8x128xf32>
    %18 = arith.addf %16, %17 : vector<8x128xf32>
    %19 = vector.extract_strided_slice %18 {offsets = [0, 0], sizes = [8, 32], strides = [1, 1]} : vector<8x128xf32> to vector<8x32xf32>
    %20 = vector.extract_strided_slice %18 {offsets = [0, 32], sizes = [8, 32], strides = [1, 1]} : vector<8x128xf32> to vector<8x32xf32>
    %21 = vector.extract_strided_slice %14 {offsets = [0, 64], sizes = [8, 32], strides = [1, 1]} : vector<8x128xf32> to vector<8x32xf32>
    %22 = vector.extract_strided_slice %18 {offsets = [0, 96], sizes = [8, 32], strides = [1, 1]} : vector<8x128xf32> to vector<8x32xf32>
    %23 = arith.mulf %20, %10 : vector<8x32xf32>
    %24 = arith.mulf %19, %21 : vector<8x32xf32>
    %25 = arith.addf %23, %24 : vector<8x32xf32>
    %26 = math.tanh %25 : vector<8x32xf32>
    %27 = arith.mulf %22, %26 : vector<8x32xf32>
    %28 = arith.truncf %27 : vector<8x32xf32> to vector<8x32xbf16>
    %c0_17 = arith.constant 0 : index
    %c0_18 = arith.constant 0 : index
    %29 = vector.load %arg15[%c0_17, %c0_18] : memref<64x32xbf16, #tpu.memory_space<vmem>>, vector<8x32xbf16>
    tpu.vector_store %arg15[%c0_17, %c0_18], %28 {strides = array<i32>} : memref<64x32xbf16, #tpu.memory_space<vmem>>, vector<8x32xbf16>,
    %c8 = arith.constant 8 : index
    %c0_19 = arith.constant 0 : index
    %30 = vector.load %arg14[%c8, %c0_19] : memref<64x128xf32, #tpu.memory_space<vmem>>, vector<8x128xf32>
    %cst_20 = arith.constant dense<0.000000e+00> : vector<8x128xf32>
    %31 = tpu.matmul %28, %8, %cst_20 {dimension_numbers = #tpu.dot_dimension_numbers<[1], [0], [0], [1], [0, 0, 1, 1], [], []>} : vector<8x32xbf16>, vector<32x128xbf16>, vector<8x128xf32> -> vector<8x128xf32>
    %32 = arith.addf %30, %31 : vector<8x128xf32>
    %33 = math.tanh %32 : vector<8x128xf32>
    %cst_21 = arith.constant 5.000000e-01 : f32
    %34 = vector.broadcast %cst_21 : f32 to vector<8x128xf32>
    %35 = arith.mulf %34, %33 : vector<8x128xf32>
    %cst_22 = arith.constant 5.000000e-01 : f32
    %36 = vector.broadcast %cst_22 : f32 to vector<8x128xf32>
    %37 = arith.addf %35, %36 : vector<8x128xf32>
    %38 = vector.extract_strided_slice %37 {offsets = [0, 0], sizes = [8, 32], strides = [1, 1]} : vector<8x128xf32> to vector<8x32xf32>
    %39 = vector.extract_strided_slice %37 {offsets = [0, 32], sizes = [8, 32], strides = [1, 1]} : vector<8x128xf32> to vector<8x32xf32>
    %40 = vector.extract_strided_slice %33 {offsets = [0, 64], sizes = [8, 32], strides = [1, 1]} : vector<8x128xf32> to vector<8x32xf32>
    %41 = vector.extract_strided_slice %37 {offsets = [0, 96], sizes = [8, 32], strides = [1, 1]} : vector<8x128xf32> to vector<8x32xf32>
    %42 = arith.mulf %39, %25 : vector<8x32xf32>
    %43 = arith.mulf %38, %40 : vector<8x32xf32>
    %44 = arith.addf %42, %43 : vector<8x32xf32>
    %45 = math.tanh %44 : vector<8x32xf32>
    %46 = arith.mulf %41, %45 : vector<8x32xf32>
    %47 = arith.truncf %46 : vector<8x32xf32> to vector<8x32xbf16>
    %c8_23 = arith.constant 8 : index
    %c0_24 = arith.constant 0 : index
    %48 = vector.load %arg15[%c8_23, %c0_24] : memref<64x32xbf16, #tpu.memory_space<vmem>>, vector<8x32xbf16>
    tpu.vector_store %arg15[%c8_23, %c0_24], %47 {strides = array<i32>} : memref<64x32xbf16, #tpu.memory_space<vmem>>, vector<8x32xbf16>,
    %c16 = arith.constant 16 : index
    %c0_25 = arith.constant 0 : index
    %49 = vector.load %arg14[%c16, %c0_25] : memref<64x128xf32, #tpu.memory_space<vmem>>, vector<8x128xf32>
    %cst_26 = arith.constant dense<0.000000e+00> : vector<8x128xf32>
    %50 = tpu.matmul %47, %8, %cst_26 {dimension_numbers = #tpu.dot_dimension_numbers<[1], [0], [0], [1], [0, 0, 1, 1], [], []>} : vector<8x32xbf16>, vector<32x128xbf16>, vector<8x128xf32> -> vector<8x128xf32>
    %51 = arith.addf %49, %50 : vector<8x128xf32>
    %52 = math.tanh %51 : vector<8x128xf32>
    %cst_27 = arith.constant 5.000000e-01 : f32
    %53 = vector.broadcast %cst_27 : f32 to vector<8x128xf32>
    %54 = arith.mulf %53, %52 : vector<8x128xf32>
    %cst_28 = arith.constant 5.000000e-01 : f32
    %55 = vector.broadcast %cst_28 : f32 to vector<8x128xf32>
    %56 = arith.addf %54, %55 : vector<8x128xf32>
    %57 = vector.extract_strided_slice %56 {offsets = [0, 0], sizes = [8, 32], strides = [1, 1]} : vector<8x128xf32> to vector<8x32xf32>
    %58 = vector.extract_strided_slice %56 {offsets = [0, 32], sizes = [8, 32], strides = [1, 1]} : vector<8x128xf32> to vector<8x32xf32>
    %59 = vector.extract_strided_slice %52 {offsets = [0, 64], sizes = [8, 32], strides = [1, 1]} : vector<8x128xf32> to vector<8x32xf32>
    %60 = vector.extract_strided_slice %56 {offsets = [0, 96], sizes = [8, 32], strides = [1, 1]} : vector<8x128xf32> to vector<8x32xf32>
    %61 = arith.mulf %58, %44 : vector<8x32xf32>
    %62 = arith.mulf %57, %59 : vector<8x32xf32>
    %63 = arith.addf %61, %62 : vector<8x32xf32>
    %64 = math.tanh %63 : vector<8x32xf32>
    %65 = arith.mulf %60, %64 : vector<8x32xf32>
    %66 = arith.truncf %65 : vector<8x32xf32> to vector<8x32xbf16>
    %c16_29 = arith.constant 16 : index
    %c0_30 = arith.constant 0 : index
    %67 = vector.load %arg15[%c16_29, %c0_30] : memref<64x32xbf16, #tpu.memory_space<vmem>>, vector<8x32xbf16>
    tpu.vector_store %arg15[%c16_29, %c0_30], %66 {strides = array<i32>} : memref<64x32xbf16, #tpu.memory_space<vmem>>, vector<8x32xbf16>,
    %c24 = arith.constant 24 : index
    %c0_31 = arith.constant 0 : index
    %68 = vector.load %arg14[%c24, %c0_31] : memref<64x128xf32, #tpu.memory_space<vmem>>, vector<8x128xf32>
    %cst_32 = arith.constant dense<0.000000e+00> : vector<8x128xf32>
    %69 = tpu.matmul %66, %8, %cst_32 {dimension_numbers = #tpu.dot_dimension_numbers<[1], [0], [0], [1], [0, 0, 1, 1], [], []>} : vector<8x32xbf16>, vector<32x128xbf16>, vector<8x128xf32> -> vector<8x128xf32>
    %70 = arith.addf %68, %69 : vector<8x128xf32>
    %71 = math.tanh %70 : vector<8x128xf32>
    %cst_33 = arith.constant 5.000000e-01 : f32
    %72 = vector.broadcast %cst_33 : f32 to vector<8x128xf32>
    %73 = arith.mulf %72, %71 : vector<8x128xf32>
    %cst_34 = arith.constant 5.000000e-01 : f32
    %74 = vector.broadcast %cst_34 : f32 to vector<8x128xf32>
    %75 = arith.addf %73, %74 : vector<8x128xf32>
    %76 = vector.extract_strided_slice %75 {offsets = [0, 0], sizes = [8, 32], strides = [1, 1]} : vector<8x128xf32> to vector<8x32xf32>
    %77 = vector.extract_strided_slice %75 {offsets = [0, 32], sizes = [8, 32], strides = [1, 1]} : vector<8x128xf32> to vector<8x32xf32>
    %78 = vector.extract_strided_slice %71 {offsets = [0, 64], sizes = [8, 32], strides = [1, 1]} : vector<8x128xf32> to vector<8x32xf32>
    %79 = vector.extract_strided_slice %75 {offsets = [0, 96], sizes = [8, 32], strides = [1, 1]} : vector<8x128xf32> to vector<8x32xf32>
    %80 = arith.mulf %77, %63 : vector<8x32xf32>
    %81 = arith.mulf %76, %78 : vector<8x32xf32>
    %82 = arith.addf %80, %81 : vector<8x32xf32>
    %83 = math.tanh %82 : vector<8x32xf32>
    %84 = arith.mulf %79, %83 : vector<8x32xf32>
    %85 = arith.truncf %84 : vector<8x32xf32> to vector<8x32xbf16>
    %c24_35 = arith.constant 24 : index
    %c0_36 = arith.constant 0 : index
    %86 = vector.load %arg15[%c24_35, %c0_36] : memref<64x32xbf16, #tpu.memory_space<vmem>>, vector<8x32xbf16>
    tpu.vector_store %arg15[%c24_35, %c0_36], %85 {strides = array<i32>} : memref<64x32xbf16, #tpu.memory_space<vmem>>, vector<8x32xbf16>,
    %c32 = arith.constant 32 : index
    %c0_37 = arith.constant 0 : index
    %87 = vector.load %arg14[%c32, %c0_37] : memref<64x128xf32, #tpu.memory_space<vmem>>, vector<8x128xf32>
    %cst_38 = arith.constant dense<0.000000e+00> : vector<8x128xf32>
    %88 = tpu.matmul %85, %8, %cst_38 {dimension_numbers = #tpu.dot_dimension_numbers<[1], [0], [0], [1], [0, 0, 1, 1], [], []>} : vector<8x32xbf16>, vector<32x128xbf16>, vector<8x128xf32> -> vector<8x128xf32>
    %89 = arith.addf %87, %88 : vector<8x128xf32>
    %90 = math.tanh %89 : vector<8x128xf32>
    %cst_39 = arith.constant 5.000000e-01 : f32
    %91 = vector.broadcast %cst_39 : f32 to vector<8x128xf32>
    %92 = arith.mulf %91, %90 : vector<8x128xf32>
    %cst_40 = arith.constant 5.000000e-01 : f32
    %93 = vector.broadcast %cst_40 : f32 to vector<8x128xf32>
    %94 = arith.addf %92, %93 : vector<8x128xf32>
    %95 = vector.extract_strided_slice %94 {offsets = [0, 0], sizes = [8, 32], strides = [1, 1]} : vector<8x128xf32> to vector<8x32xf32>
    %96 = vector.extract_strided_slice %94 {offsets = [0, 32], sizes = [8, 32], strides = [1, 1]} : vector<8x128xf32> to vector<8x32xf32>
    %97 = vector.extract_strided_slice %90 {offsets = [0, 64], sizes = [8, 32], strides = [1, 1]} : vector<8x128xf32> to vector<8x32xf32>
    %98 = vector.extract_strided_slice %94 {offsets = [0, 96], sizes = [8, 32], strides = [1, 1]} : vector<8x128xf32> to vector<8x32xf32>
    %99 = arith.mulf %96, %82 : vector<8x32xf32>
    %100 = arith.mulf %95, %97 : vector<8x32xf32>
    %101 = arith.addf %99, %100 : vector<8x32xf32>
    %102 = math.tanh %101 : vector<8x32xf32>
    %103 = arith.mulf %98, %102 : vector<8x32xf32>
    %104 = arith.truncf %103 : vector<8x32xf32> to vector<8x32xbf16>
    %c32_41 = arith.constant 32 : index
    %c0_42 = arith.constant 0 : index
    %105 = vector.load %arg15[%c32_41, %c0_42] : memref<64x32xbf16, #tpu.memory_space<vmem>>, vector<8x32xbf16>
    tpu.vector_store %arg15[%c32_41, %c0_42], %104 {strides = array<i32>} : memref<64x32xbf16, #tpu.memory_space<vmem>>, vector<8x32xbf16>,
    %c40 = arith.constant 40 : index
    %c0_43 = arith.constant 0 : index
    %106 = vector.load %arg14[%c40, %c0_43] : memref<64x128xf32, #tpu.memory_space<vmem>>, vector<8x128xf32>
    %cst_44 = arith.constant dense<0.000000e+00> : vector<8x128xf32>
    %107 = tpu.matmul %104, %8, %cst_44 {dimension_numbers = #tpu.dot_dimension_numbers<[1], [0], [0], [1], [0, 0, 1, 1], [], []>} : vector<8x32xbf16>, vector<32x128xbf16>, vector<8x128xf32> -> vector<8x128xf32>
    %108 = arith.addf %106, %107 : vector<8x128xf32>
    %109 = math.tanh %108 : vector<8x128xf32>
    %cst_45 = arith.constant 5.000000e-01 : f32
    %110 = vector.broadcast %cst_45 : f32 to vector<8x128xf32>
    %111 = arith.mulf %110, %109 : vector<8x128xf32>
    %cst_46 = arith.constant 5.000000e-01 : f32
    %112 = vector.broadcast %cst_46 : f32 to vector<8x128xf32>
    %113 = arith.addf %111, %112 : vector<8x128xf32>
    %114 = vector.extract_strided_slice %113 {offsets = [0, 0], sizes = [8, 32], strides = [1, 1]} : vector<8x128xf32> to vector<8x32xf32>
    %115 = vector.extract_strided_slice %113 {offsets = [0, 32], sizes = [8, 32], strides = [1, 1]} : vector<8x128xf32> to vector<8x32xf32>
    %116 = vector.extract_strided_slice %109 {offsets = [0, 64], sizes = [8, 32], strides = [1, 1]} : vector<8x128xf32> to vector<8x32xf32>
    %117 = vector.extract_strided_slice %113 {offsets = [0, 96], sizes = [8, 32], strides = [1, 1]} : vector<8x128xf32> to vector<8x32xf32>
    %118 = arith.mulf %115, %101 : vector<8x32xf32>
    %119 = arith.mulf %114, %116 : vector<8x32xf32>
    %120 = arith.addf %118, %119 : vector<8x32xf32>
    %121 = math.tanh %120 : vector<8x32xf32>
    %122 = arith.mulf %117, %121 : vector<8x32xf32>
    %123 = arith.truncf %122 : vector<8x32xf32> to vector<8x32xbf16>
    %c40_47 = arith.constant 40 : index
    %c0_48 = arith.constant 0 : index
    %124 = vector.load %arg15[%c40_47, %c0_48] : memref<64x32xbf16, #tpu.memory_space<vmem>>, vector<8x32xbf16>
    tpu.vector_store %arg15[%c40_47, %c0_48], %123 {strides = array<i32>} : memref<64x32xbf16, #tpu.memory_space<vmem>>, vector<8x32xbf16>,
    %c48 = arith.constant 48 : index
    %c0_49 = arith.constant 0 : index
    %125 = vector.load %arg14[%c48, %c0_49] : memref<64x128xf32, #tpu.memory_space<vmem>>, vector<8x128xf32>
    %cst_50 = arith.constant dense<0.000000e+00> : vector<8x128xf32>
    %126 = tpu.matmul %123, %8, %cst_50 {dimension_numbers = #tpu.dot_dimension_numbers<[1], [0], [0], [1], [0, 0, 1, 1], [], []>} : vector<8x32xbf16>, vector<32x128xbf16>, vector<8x128xf32> -> vector<8x128xf32>
    %127 = arith.addf %125, %126 : vector<8x128xf32>
    %128 = math.tanh %127 : vector<8x128xf32>
    %cst_51 = arith.constant 5.000000e-01 : f32
    %129 = vector.broadcast %cst_51 : f32 to vector<8x128xf32>
    %130 = arith.mulf %129, %128 : vector<8x128xf32>
    %cst_52 = arith.constant 5.000000e-01 : f32
    %131 = vector.broadcast %cst_52 : f32 to vector<8x128xf32>
    %132 = arith.addf %130, %131 : vector<8x128xf32>
    %133 = vector.extract_strided_slice %132 {offsets = [0, 0], sizes = [8, 32], strides = [1, 1]} : vector<8x128xf32> to vector<8x32xf32>
    %134 = vector.extract_strided_slice %132 {offsets = [0, 32], sizes = [8, 32], strides = [1, 1]} : vector<8x128xf32> to vector<8x32xf32>
    %135 = vector.extract_strided_slice %128 {offsets = [0, 64], sizes = [8, 32], strides = [1, 1]} : vector<8x128xf32> to vector<8x32xf32>
    %136 = vector.extract_strided_slice %132 {offsets = [0, 96], sizes = [8, 32], strides = [1, 1]} : vector<8x128xf32> to vector<8x32xf32>
    %137 = arith.mulf %134, %120 : vector<8x32xf32>
    %138 = arith.mulf %133, %135 : vector<8x32xf32>
    %139 = arith.addf %137, %138 : vector<8x32xf32>
    %140 = math.tanh %139 : vector<8x32xf32>
    %141 = arith.mulf %136, %140 : vector<8x32xf32>
    %142 = arith.truncf %141 : vector<8x32xf32> to vector<8x32xbf16>
    %c48_53 = arith.constant 48 : index
    %c0_54 = arith.constant 0 : index
    %143 = vector.load %arg15[%c48_53, %c0_54] : memref<64x32xbf16, #tpu.memory_space<vmem>>, vector<8x32xbf16>
    tpu.vector_store %arg15[%c48_53, %c0_54], %142 {strides = array<i32>} : memref<64x32xbf16, #tpu.memory_space<vmem>>, vector<8x32xbf16>,
    %c56 = arith.constant 56 : index
    %c0_55 = arith.constant 0 : index
    %144 = vector.load %arg14[%c56, %c0_55] : memref<64x128xf32, #tpu.memory_space<vmem>>, vector<8x128xf32>
    %cst_56 = arith.constant dense<0.000000e+00> : vector<8x128xf32>
    %145 = tpu.matmul %142, %8, %cst_56 {dimension_numbers = #tpu.dot_dimension_numbers<[1], [0], [0], [1], [0, 0, 1, 1], [], []>} : vector<8x32xbf16>, vector<32x128xbf16>, vector<8x128xf32> -> vector<8x128xf32>
    %146 = arith.addf %144, %145 : vector<8x128xf32>
    %147 = math.tanh %146 : vector<8x128xf32>
    %cst_57 = arith.constant 5.000000e-01 : f32
    %148 = vector.broadcast %cst_57 : f32 to vector<8x128xf32>
    %149 = arith.mulf %148, %147 : vector<8x128xf32>
    %cst_58 = arith.constant 5.000000e-01 : f32
    %150 = vector.broadcast %cst_58 : f32 to vector<8x128xf32>
    %151 = arith.addf %149, %150 : vector<8x128xf32>
    %152 = vector.extract_strided_slice %151 {offsets = [0, 0], sizes = [8, 32], strides = [1, 1]} : vector<8x128xf32> to vector<8x32xf32>
    %153 = vector.extract_strided_slice %151 {offsets = [0, 32], sizes = [8, 32], strides = [1, 1]} : vector<8x128xf32> to vector<8x32xf32>
    %154 = vector.extract_strided_slice %147 {offsets = [0, 64], sizes = [8, 32], strides = [1, 1]} : vector<8x128xf32> to vector<8x32xf32>
    %155 = vector.extract_strided_slice %151 {offsets = [0, 96], sizes = [8, 32], strides = [1, 1]} : vector<8x128xf32> to vector<8x32xf32>
    %156 = arith.mulf %153, %139 : vector<8x32xf32>
    %157 = arith.mulf %152, %154 : vector<8x32xf32>
    %158 = arith.addf %156, %157 : vector<8x32xf32>
    %159 = math.tanh %158 : vector<8x32xf32>
    %160 = arith.mulf %155, %159 : vector<8x32xf32>
    %161 = arith.truncf %160 : vector<8x32xf32> to vector<8x32xbf16>
    %c56_59 = arith.constant 56 : index
    %c0_60 = arith.constant 0 : index
    %162 = vector.load %arg15[%c56_59, %c0_60] : memref<64x32xbf16, #tpu.memory_space<vmem>>, vector<8x32xbf16>
    tpu.vector_store %arg15[%c56_59, %c0_60], %161 {strides = array<i32>} : memref<64x32xbf16, #tpu.memory_space<vmem>>, vector<8x32xbf16>,
    %c0_61 = arith.constant 0 : index
    %c0_62 = arith.constant 0 : index
    %163 = vector.load %arg15[%c0_61, %c0_62] : memref<64x32xbf16, #tpu.memory_space<vmem>>, vector<64x32xbf16>
    %c0_63 = arith.constant 0 : index
    %c0_64 = arith.constant 0 : index
    %164 = vector.load %arg5[%c0_63, %c0_64] : memref<32x128xbf16, #tpu.memory_space<vmem>>, vector<32x128xbf16>
    %cst_65 = arith.constant dense<0.000000e+00> : vector<64x128xf32>
    %165 = tpu.matmul %163, %164, %cst_65 {dimension_numbers = #tpu.dot_dimension_numbers<[1], [0], [0], [1], [0, 0, 1, 1], [], []>} : vector<64x32xbf16>, vector<32x128xbf16>, vector<64x128xf32> -> vector<64x128xf32>
    %c0_66 = arith.constant 0 : index
    %c0_67 = arith.constant 0 : index
    %166 = vector.load %arg7[%c0_66, %c0_67] : memref<1x128xf32, #tpu.memory_space<vmem>>, vector<1x128xf32>
    %167 = vector.broadcast %166 : vector<1x128xf32> to vector<64x128xf32>
    %168 = arith.addf %165, %167 : vector<64x128xf32>
    %c0_68 = arith.constant 0 : index
    %c0_69 = arith.constant 0 : index
    %169 = vector.load %arg14[%c0_68, %c0_69] : memref<64x128xf32, #tpu.memory_space<vmem>>, vector<64x128xf32>
    tpu.vector_store %arg14[%c0_68, %c0_69], %168 {strides = array<i32>} : memref<64x128xf32, #tpu.memory_space<vmem>>, vector<64x128xf32>,
    %c0_70 = arith.constant 0 : index
    %c0_71 = arith.constant 0 : index
    %170 = vector.load %arg6[%c0_70, %c0_71] : memref<32x128xbf16, #tpu.memory_space<vmem>>, vector<32x128xbf16>
    %cst_72 = arith.constant 0.000000e+00 : bf16
    %171 = vector.broadcast %cst_72 : bf16 to vector<8x32xbf16>
    %cst_73 = arith.constant 0.000000e+00 : f32
    %172 = vector.broadcast %cst_73 : f32 to vector<8x32xf32>
    %c0_74 = arith.constant 0 : index
    %c0_75 = arith.constant 0 : index
    %173 = vector.load %arg14[%c0_74, %c0_75] : memref<64x128xf32, #tpu.memory_space<vmem>>, vector<8x128xf32>
    %cst_76 = arith.constant dense<0.000000e+00> : vector<8x128xf32>
    %174 = tpu.matmul %171, %170, %cst_76 {dimension_numbers = #tpu.dot_dimension_numbers<[1], [0], [0], [1], [0, 0, 1, 1], [], []>} : vector<8x32xbf16>, vector<32x128xbf16>, vector<8x128xf32> -> vector<8x128xf32>
    %175 = arith.addf %173, %174 : vector<8x128xf32>
    %176 = math.tanh %175 : vector<8x128xf32>
    %cst_77 = arith.constant 5.000000e-01 : f32
    %177 = vector.broadcast %cst_77 : f32 to vector<8x128xf32>
    %178 = arith.mulf %177, %176 : vector<8x128xf32>
    %cst_78 = arith.constant 5.000000e-01 : f32
    %179 = vector.broadcast %cst_78 : f32 to vector<8x128xf32>
    %180 = arith.addf %178, %179 : vector<8x128xf32>
    %181 = vector.extract_strided_slice %180 {offsets = [0, 0], sizes = [8, 32], strides = [1, 1]} : vector<8x128xf32> to vector<8x32xf32>
    %182 = vector.extract_strided_slice %180 {offsets = [0, 32], sizes = [8, 32], strides = [1, 1]} : vector<8x128xf32> to vector<8x32xf32>
    %183 = vector.extract_strided_slice %176 {offsets = [0, 64], sizes = [8, 32], strides = [1, 1]} : vector<8x128xf32> to vector<8x32xf32>
    %184 = vector.extract_strided_slice %180 {offsets = [0, 96], sizes = [8, 32], strides = [1, 1]} : vector<8x128xf32> to vector<8x32xf32>
    %185 = arith.mulf %182, %172 : vector<8x32xf32>
    %186 = arith.mulf %181, %183 : vector<8x32xf32>
    %187 = arith.addf %185, %186 : vector<8x32xf32>
    %188 = math.tanh %187 : vector<8x32xf32>
    %189 = arith.mulf %184, %188 : vector<8x32xf32>
    %190 = arith.truncf %189 : vector<8x32xf32> to vector<8x32xbf16>
    %c8_79 = arith.constant 8 : index
    %c0_80 = arith.constant 0 : index
    %191 = vector.load %arg14[%c8_79, %c0_80] : memref<64x128xf32, #tpu.memory_space<vmem>>, vector<8x128xf32>
    %cst_81 = arith.constant dense<0.000000e+00> : vector<8x128xf32>
    %192 = tpu.matmul %190, %170, %cst_81 {dimension_numbers = #tpu.dot_dimension_numbers<[1], [0], [0], [1], [0, 0, 1, 1], [], []>} : vector<8x32xbf16>, vector<32x128xbf16>, vector<8x128xf32> -> vector<8x128xf32>
    %193 = arith.addf %191, %192 : vector<8x128xf32>
    %194 = math.tanh %193 : vector<8x128xf32>
    %cst_82 = arith.constant 5.000000e-01 : f32
    %195 = vector.broadcast %cst_82 : f32 to vector<8x128xf32>
    %196 = arith.mulf %195, %194 : vector<8x128xf32>
    %cst_83 = arith.constant 5.000000e-01 : f32
    %197 = vector.broadcast %cst_83 : f32 to vector<8x128xf32>
    %198 = arith.addf %196, %197 : vector<8x128xf32>
    %199 = vector.extract_strided_slice %198 {offsets = [0, 0], sizes = [8, 32], strides = [1, 1]} : vector<8x128xf32> to vector<8x32xf32>
    %200 = vector.extract_strided_slice %198 {offsets = [0, 32], sizes = [8, 32], strides = [1, 1]} : vector<8x128xf32> to vector<8x32xf32>
    %201 = vector.extract_strided_slice %194 {offsets = [0, 64], sizes = [8, 32], strides = [1, 1]} : vector<8x128xf32> to vector<8x32xf32>
    %202 = vector.extract_strided_slice %198 {offsets = [0, 96], sizes = [8, 32], strides = [1, 1]} : vector<8x128xf32> to vector<8x32xf32>
    %203 = arith.mulf %200, %187 : vector<8x32xf32>
    %204 = arith.mulf %199, %201 : vector<8x32xf32>
    %205 = arith.addf %203, %204 : vector<8x32xf32>
    %206 = math.tanh %205 : vector<8x32xf32>
    %207 = arith.mulf %202, %206 : vector<8x32xf32>
    %208 = arith.truncf %207 : vector<8x32xf32> to vector<8x32xbf16>
    %c16_84 = arith.constant 16 : index
    %c0_85 = arith.constant 0 : index
    %209 = vector.load %arg14[%c16_84, %c0_85] : memref<64x128xf32, #tpu.memory_space<vmem>>, vector<8x128xf32>
    %cst_86 = arith.constant dense<0.000000e+00> : vector<8x128xf32>
    %210 = tpu.matmul %208, %170, %cst_86 {dimension_numbers = #tpu.dot_dimension_numbers<[1], [0], [0], [1], [0, 0, 1, 1], [], []>} : vector<8x32xbf16>, vector<32x128xbf16>, vector<8x128xf32> -> vector<8x128xf32>
    %211 = arith.addf %209, %210 : vector<8x128xf32>
    %212 = math.tanh %211 : vector<8x128xf32>
    %cst_87 = arith.constant 5.000000e-01 : f32
    %213 = vector.broadcast %cst_87 : f32 to vector<8x128xf32>
    %214 = arith.mulf %213, %212 : vector<8x128xf32>
    %cst_88 = arith.constant 5.000000e-01 : f32
    %215 = vector.broadcast %cst_88 : f32 to vector<8x128xf32>
    %216 = arith.addf %214, %215 : vector<8x128xf32>
    %217 = vector.extract_strided_slice %216 {offsets = [0, 0], sizes = [8, 32], strides = [1, 1]} : vector<8x128xf32> to vector<8x32xf32>
    %218 = vector.extract_strided_slice %216 {offsets = [0, 32], sizes = [8, 32], strides = [1, 1]} : vector<8x128xf32> to vector<8x32xf32>
    %219 = vector.extract_strided_slice %212 {offsets = [0, 64], sizes = [8, 32], strides = [1, 1]} : vector<8x128xf32> to vector<8x32xf32>
    %220 = vector.extract_strided_slice %216 {offsets = [0, 96], sizes = [8, 32], strides = [1, 1]} : vector<8x128xf32> to vector<8x32xf32>
    %221 = arith.mulf %218, %205 : vector<8x32xf32>
    %222 = arith.mulf %217, %219 : vector<8x32xf32>
    %223 = arith.addf %221, %222 : vector<8x32xf32>
    %224 = math.tanh %223 : vector<8x32xf32>
    %225 = arith.mulf %220, %224 : vector<8x32xf32>
    %226 = arith.truncf %225 : vector<8x32xf32> to vector<8x32xbf16>
    %c24_89 = arith.constant 24 : index
    %c0_90 = arith.constant 0 : index
    %227 = vector.load %arg14[%c24_89, %c0_90] : memref<64x128xf32, #tpu.memory_space<vmem>>, vector<8x128xf32>
    %cst_91 = arith.constant dense<0.000000e+00> : vector<8x128xf32>
    %228 = tpu.matmul %226, %170, %cst_91 {dimension_numbers = #tpu.dot_dimension_numbers<[1], [0], [0], [1], [0, 0, 1, 1], [], []>} : vector<8x32xbf16>, vector<32x128xbf16>, vector<8x128xf32> -> vector<8x128xf32>
    %229 = arith.addf %227, %228 : vector<8x128xf32>
    %230 = math.tanh %229 : vector<8x128xf32>
    %cst_92 = arith.constant 5.000000e-01 : f32
    %231 = vector.broadcast %cst_92 : f32 to vector<8x128xf32>
    %232 = arith.mulf %231, %230 : vector<8x128xf32>
    %cst_93 = arith.constant 5.000000e-01 : f32
    %233 = vector.broadcast %cst_93 : f32 to vector<8x128xf32>
    %234 = arith.addf %232, %233 : vector<8x128xf32>
    %235 = vector.extract_strided_slice %234 {offsets = [0, 0], sizes = [8, 32], strides = [1, 1]} : vector<8x128xf32> to vector<8x32xf32>
    %236 = vector.extract_strided_slice %234 {offsets = [0, 32], sizes = [8, 32], strides = [1, 1]} : vector<8x128xf32> to vector<8x32xf32>
    %237 = vector.extract_strided_slice %230 {offsets = [0, 64], sizes = [8, 32], strides = [1, 1]} : vector<8x128xf32> to vector<8x32xf32>
    %238 = vector.extract_strided_slice %234 {offsets = [0, 96], sizes = [8, 32], strides = [1, 1]} : vector<8x128xf32> to vector<8x32xf32>
    %239 = arith.mulf %236, %223 : vector<8x32xf32>
    %240 = arith.mulf %235, %237 : vector<8x32xf32>
    %241 = arith.addf %239, %240 : vector<8x32xf32>
    %242 = math.tanh %241 : vector<8x32xf32>
    %243 = arith.mulf %238, %242 : vector<8x32xf32>
    %244 = arith.truncf %243 : vector<8x32xf32> to vector<8x32xbf16>
    %c32_94 = arith.constant 32 : index
    %c0_95 = arith.constant 0 : index
    %245 = vector.load %arg14[%c32_94, %c0_95] : memref<64x128xf32, #tpu.memory_space<vmem>>, vector<8x128xf32>
    %cst_96 = arith.constant dense<0.000000e+00> : vector<8x128xf32>
    %246 = tpu.matmul %244, %170, %cst_96 {dimension_numbers = #tpu.dot_dimension_numbers<[1], [0], [0], [1], [0, 0, 1, 1], [], []>} : vector<8x32xbf16>, vector<32x128xbf16>, vector<8x128xf32> -> vector<8x128xf32>
    %247 = arith.addf %245, %246 : vector<8x128xf32>
    %248 = math.tanh %247 : vector<8x128xf32>
    %cst_97 = arith.constant 5.000000e-01 : f32
    %249 = vector.broadcast %cst_97 : f32 to vector<8x128xf32>
    %250 = arith.mulf %249, %248 : vector<8x128xf32>
    %cst_98 = arith.constant 5.000000e-01 : f32
    %251 = vector.broadcast %cst_98 : f32 to vector<8x128xf32>
    %252 = arith.addf %250, %251 : vector<8x128xf32>
    %253 = vector.extract_strided_slice %252 {offsets = [0, 0], sizes = [8, 32], strides = [1, 1]} : vector<8x128xf32> to vector<8x32xf32>
    %254 = vector.extract_strided_slice %252 {offsets = [0, 32], sizes = [8, 32], strides = [1, 1]} : vector<8x128xf32> to vector<8x32xf32>
    %255 = vector.extract_strided_slice %248 {offsets = [0, 64], sizes = [8, 32], strides = [1, 1]} : vector<8x128xf32> to vector<8x32xf32>
    %256 = vector.extract_strided_slice %252 {offsets = [0, 96], sizes = [8, 32], strides = [1, 1]} : vector<8x128xf32> to vector<8x32xf32>
    %257 = arith.mulf %254, %241 : vector<8x32xf32>
    %258 = arith.mulf %253, %255 : vector<8x32xf32>
    %259 = arith.addf %257, %258 : vector<8x32xf32>
    %260 = math.tanh %259 : vector<8x32xf32>
    %261 = arith.mulf %256, %260 : vector<8x32xf32>
    %262 = arith.truncf %261 : vector<8x32xf32> to vector<8x32xbf16>
    %c40_99 = arith.constant 40 : index
    %c0_100 = arith.constant 0 : index
    %263 = vector.load %arg14[%c40_99, %c0_100] : memref<64x128xf32, #tpu.memory_space<vmem>>, vector<8x128xf32>
    %cst_101 = arith.constant dense<0.000000e+00> : vector<8x128xf32>
    %264 = tpu.matmul %262, %170, %cst_101 {dimension_numbers = #tpu.dot_dimension_numbers<[1], [0], [0], [1], [0, 0, 1, 1], [], []>} : vector<8x32xbf16>, vector<32x128xbf16>, vector<8x128xf32> -> vector<8x128xf32>
    %265 = arith.addf %263, %264 : vector<8x128xf32>
    %266 = math.tanh %265 : vector<8x128xf32>
    %cst_102 = arith.constant 5.000000e-01 : f32
    %267 = vector.broadcast %cst_102 : f32 to vector<8x128xf32>
    %268 = arith.mulf %267, %266 : vector<8x128xf32>
    %cst_103 = arith.constant 5.000000e-01 : f32
    %269 = vector.broadcast %cst_103 : f32 to vector<8x128xf32>
    %270 = arith.addf %268, %269 : vector<8x128xf32>
    %271 = vector.extract_strided_slice %270 {offsets = [0, 0], sizes = [8, 32], strides = [1, 1]} : vector<8x128xf32> to vector<8x32xf32>
    %272 = vector.extract_strided_slice %270 {offsets = [0, 32], sizes = [8, 32], strides = [1, 1]} : vector<8x128xf32> to vector<8x32xf32>
    %273 = vector.extract_strided_slice %266 {offsets = [0, 64], sizes = [8, 32], strides = [1, 1]} : vector<8x128xf32> to vector<8x32xf32>
    %274 = vector.extract_strided_slice %270 {offsets = [0, 96], sizes = [8, 32], strides = [1, 1]} : vector<8x128xf32> to vector<8x32xf32>
    %275 = arith.mulf %272, %259 : vector<8x32xf32>
    %276 = arith.mulf %271, %273 : vector<8x32xf32>
    %277 = arith.addf %275, %276 : vector<8x32xf32>
    %278 = math.tanh %277 : vector<8x32xf32>
    %279 = arith.mulf %274, %278 : vector<8x32xf32>
    %280 = arith.truncf %279 : vector<8x32xf32> to vector<8x32xbf16>
    %c48_104 = arith.constant 48 : index
    %c0_105 = arith.constant 0 : index
    %281 = vector.load %arg14[%c48_104, %c0_105] : memref<64x128xf32, #tpu.memory_space<vmem>>, vector<8x128xf32>
    %cst_106 = arith.constant dense<0.000000e+00> : vector<8x128xf32>
    %282 = tpu.matmul %280, %170, %cst_106 {dimension_numbers = #tpu.dot_dimension_numbers<[1], [0], [0], [1], [0, 0, 1, 1], [], []>} : vector<8x32xbf16>, vector<32x128xbf16>, vector<8x128xf32> -> vector<8x128xf32>
    %283 = arith.addf %281, %282 : vector<8x128xf32>
    %284 = math.tanh %283 : vector<8x128xf32>
    %cst_107 = arith.constant 5.000000e-01 : f32
    %285 = vector.broadcast %cst_107 : f32 to vector<8x128xf32>
    %286 = arith.mulf %285, %284 : vector<8x128xf32>
    %cst_108 = arith.constant 5.000000e-01 : f32
    %287 = vector.broadcast %cst_108 : f32 to vector<8x128xf32>
    %288 = arith.addf %286, %287 : vector<8x128xf32>
    %289 = vector.extract_strided_slice %288 {offsets = [0, 0], sizes = [8, 32], strides = [1, 1]} : vector<8x128xf32> to vector<8x32xf32>
    %290 = vector.extract_strided_slice %288 {offsets = [0, 32], sizes = [8, 32], strides = [1, 1]} : vector<8x128xf32> to vector<8x32xf32>
    %291 = vector.extract_strided_slice %284 {offsets = [0, 64], sizes = [8, 32], strides = [1, 1]} : vector<8x128xf32> to vector<8x32xf32>
    %292 = vector.extract_strided_slice %288 {offsets = [0, 96], sizes = [8, 32], strides = [1, 1]} : vector<8x128xf32> to vector<8x32xf32>
    %293 = arith.mulf %290, %277 : vector<8x32xf32>
    %294 = arith.mulf %289, %291 : vector<8x32xf32>
    %295 = arith.addf %293, %294 : vector<8x32xf32>
    %296 = math.tanh %295 : vector<8x32xf32>
    %297 = arith.mulf %292, %296 : vector<8x32xf32>
    %298 = arith.truncf %297 : vector<8x32xf32> to vector<8x32xbf16>
    %c56_109 = arith.constant 56 : index
    %c0_110 = arith.constant 0 : index
    %299 = vector.load %arg14[%c56_109, %c0_110] : memref<64x128xf32, #tpu.memory_space<vmem>>, vector<8x128xf32>
    %cst_111 = arith.constant dense<0.000000e+00> : vector<8x128xf32>
    %300 = tpu.matmul %298, %170, %cst_111 {dimension_numbers = #tpu.dot_dimension_numbers<[1], [0], [0], [1], [0, 0, 1, 1], [], []>} : vector<8x32xbf16>, vector<32x128xbf16>, vector<8x128xf32> -> vector<8x128xf32>
    %301 = arith.addf %299, %300 : vector<8x128xf32>
    %302 = math.tanh %301 : vector<8x128xf32>
    %cst_112 = arith.constant 5.000000e-01 : f32
    %303 = vector.broadcast %cst_112 : f32 to vector<8x128xf32>
    %304 = arith.mulf %303, %302 : vector<8x128xf32>
    %cst_113 = arith.constant 5.000000e-01 : f32
    %305 = vector.broadcast %cst_113 : f32 to vector<8x128xf32>
    %306 = arith.addf %304, %305 : vector<8x128xf32>
    %307 = vector.extract_strided_slice %306 {offsets = [0, 0], sizes = [8, 32], strides = [1, 1]} : vector<8x128xf32> to vector<8x32xf32>
    %308 = vector.extract_strided_slice %306 {offsets = [0, 32], sizes = [8, 32], strides = [1, 1]} : vector<8x128xf32> to vector<8x32xf32>
    %309 = vector.extract_strided_slice %302 {offsets = [0, 64], sizes = [8, 32], strides = [1, 1]} : vector<8x128xf32> to vector<8x32xf32>
    %310 = vector.extract_strided_slice %306 {offsets = [0, 96], sizes = [8, 32], strides = [1, 1]} : vector<8x128xf32> to vector<8x32xf32>
    %311 = arith.mulf %308, %295 : vector<8x32xf32>
    %312 = arith.mulf %307, %309 : vector<8x32xf32>
    %313 = arith.addf %311, %312 : vector<8x32xf32>
    %314 = math.tanh %313 : vector<8x32xf32>
    %315 = arith.mulf %310, %314 : vector<8x32xf32>
    %316 = arith.truncf %315 : vector<8x32xf32> to vector<8x32xbf16>
    %c0_114 = arith.constant 0 : index
    %c0_115 = arith.constant 0 : index
    %317 = vector.load %arg8[%c0_114, %c0_115] : memref<32x32xbf16, #tpu.memory_space<vmem>>, vector<32x32xbf16>
    %cst_116 = arith.constant dense<0.000000e+00> : vector<8x32xf32>
    %318 = tpu.matmul %161, %317, %cst_116 {dimension_numbers = #tpu.dot_dimension_numbers<[1], [0], [0], [1], [0, 0, 1, 1], [], []>} : vector<8x32xbf16>, vector<32x32xbf16>, vector<8x32xf32> -> vector<8x32xf32>
    %c0_117 = arith.constant 0 : index
    %c0_118 = arith.constant 0 : index
    %319 = vector.load %arg9[%c0_117, %c0_118] : memref<32x32xbf16, #tpu.memory_space<vmem>>, vector<32x32xbf16>
    %cst_119 = arith.constant dense<0.000000e+00> : vector<8x32xf32>
    %320 = tpu.matmul %316, %319, %cst_119 {dimension_numbers = #tpu.dot_dimension_numbers<[1], [0], [0], [1], [0, 0, 1, 1], [], []>} : vector<8x32xbf16>, vector<32x32xbf16>, vector<8x32xf32> -> vector<8x32xf32>
    %321 = arith.addf %318, %320 : vector<8x32xf32>
    %c0_120 = arith.constant 0 : index
    %c0_121 = arith.constant 0 : index
    %322 = vector.load %arg10[%c0_120, %c0_121] : memref<1x32xf32, #tpu.memory_space<vmem>>, vector<1x32xf32>
    %323 = vector.broadcast %322 : vector<1x32xf32> to vector<8x32xf32>
    %324 = arith.addf %321, %323 : vector<8x32xf32>
    %325 = arith.truncf %324 : vector<8x32xf32> to vector<8x32xbf16>
    %c0_122 = arith.constant 0 : index
    %c0_123 = arith.constant 0 : index
    %326 = vector.load %arg11[%c0_122, %c0_123] : memref<32x8xbf16, #tpu.memory_space<vmem>>, vector<32x8xbf16>
    %cst_124 = arith.constant dense<0.000000e+00> : vector<8x8xf32>
    %327 = tpu.matmul %325, %326, %cst_124 {dimension_numbers = #tpu.dot_dimension_numbers<[1], [0], [0], [1], [0, 0, 1, 1], [], []>} : vector<8x32xbf16>, vector<32x8xbf16>, vector<8x8xf32> -> vector<8x8xf32>
    %c0_125 = arith.constant 0 : index
    %c0_126 = arith.constant 0 : index
    %328 = vector.load %arg12[%c0_125, %c0_126] : memref<1x8xf32, #tpu.memory_space<vmem>>, vector<1x8xf32>
    %329 = vector.broadcast %328 : vector<1x8xf32> to vector<8x8xf32>
    %330 = arith.addf %327, %329 : vector<8x8xf32>
    %c0_127 = arith.constant 0 : index
    %c0_128 = arith.constant 0 : index
    %331 = vector.load %arg13[%c0_127, %c0_128] : memref<8x8xf32, #tpu.memory_space<vmem>>, vector<8x8xf32>
    tpu.vector_store %arg13[%c0_127, %c0_128], %330 {strides = array<i32>} : memref<8x8xf32, #tpu.memory_space<vmem>>, vector<8x8xf32>,
    return
  }
  func.func @transform_0(%arg0: i32) -> (i32, i32, i32) {
    %c0_i32 = arith.constant 0 : i32
    %c0_i32_0 = arith.constant 0 : i32
    %c0_i32_1 = arith.constant 0 : i32
    return %arg0, %c0_i32, %c0_i32_0 : i32, i32, i32
  }
  func.func @transform_1(%arg0: i32) -> (i32, i32) {
    %c0_i32 = arith.constant 0 : i32
    %c0_i32_0 = arith.constant 0 : i32
    %c0_i32_1 = arith.constant 0 : i32
    return %c0_i32, %c0_i32_0 : i32, i32
  }
  func.func @transform_2(%arg0: i32) -> (i32, i32) {
    %c0_i32 = arith.constant 0 : i32
    %c0_i32_0 = arith.constant 0 : i32
    %c0_i32_1 = arith.constant 0 : i32
    return %c0_i32, %c0_i32_0 : i32, i32
  }
  func.func @transform_3(%arg0: i32) -> (i32, i32) {
    %c0_i32 = arith.constant 0 : i32
    %c0_i32_0 = arith.constant 0 : i32
    %c0_i32_1 = arith.constant 0 : i32
    return %c0_i32, %c0_i32_0 : i32, i32
  }
  func.func @transform_4(%arg0: i32) -> (i32, i32) {
    %c0_i32 = arith.constant 0 : i32
    %c0_i32_0 = arith.constant 0 : i32
    %c0_i32_1 = arith.constant 0 : i32
    return %c0_i32, %c0_i32_0 : i32, i32
  }
  func.func @transform_5(%arg0: i32) -> (i32, i32) {
    %c0_i32 = arith.constant 0 : i32
    %c0_i32_0 = arith.constant 0 : i32
    %c0_i32_1 = arith.constant 0 : i32
    return %c0_i32, %c0_i32_0 : i32, i32
  }
  func.func @transform_6(%arg0: i32) -> (i32, i32) {
    %c0_i32 = arith.constant 0 : i32
    %c0_i32_0 = arith.constant 0 : i32
    %c0_i32_1 = arith.constant 0 : i32
    return %c0_i32, %c0_i32_0 : i32, i32
  }
  func.func @transform_7(%arg0: i32) -> (i32, i32) {
    %c0_i32 = arith.constant 0 : i32
    %c0_i32_0 = arith.constant 0 : i32
    %c0_i32_1 = arith.constant 0 : i32
    return %c0_i32, %c0_i32_0 : i32, i32
  }
  func.func @transform_8(%arg0: i32) -> (i32, i32) {
    %c0_i32 = arith.constant 0 : i32
    %c0_i32_0 = arith.constant 0 : i32
    %c0_i32_1 = arith.constant 0 : i32
    return %c0_i32, %c0_i32_0 : i32, i32
  }
  func.func @transform_9(%arg0: i32) -> (i32, i32) {
    %c0_i32 = arith.constant 0 : i32
    %c0_i32_0 = arith.constant 0 : i32
    %c0_i32_1 = arith.constant 0 : i32
    return %c0_i32, %c0_i32_0 : i32, i32
  }
  func.func @transform_10(%arg0: i32) -> (i32, i32) {
    %c0_i32 = arith.constant 0 : i32
    %c0_i32_0 = arith.constant 0 : i32
    %c0_i32_1 = arith.constant 0 : i32
    return %c0_i32, %c0_i32_0 : i32, i32
  }
  func.func @transform_11(%arg0: i32) -> (i32, i32) {
    %c0_i32 = arith.constant 0 : i32
    %c0_i32_0 = arith.constant 0 : i32
    %c0_i32_1 = arith.constant 0 : i32
    return %c0_i32, %c0_i32_0 : i32, i32
  }
  func.func @transform_12(%arg0: i32) -> (i32, i32) {
    %c0_i32 = arith.constant 0 : i32
    %c0_i32_0 = arith.constant 0 : i32
    return %arg0, %c0_i32 : i32, i32
  }
}

</mosaic_0001>

<llo_original>
// kernel: recurrent_classifier_forward.1
$region0: #{recurrent_classifier_forward.1}
  #allocation0 [shape = 'u32[]', space=smem, size = 0x4, offset = 0x4, fixed_abs, tag = 'smem constant byte address 0x4 - core index']
  #allocation1 [shape = 'u32[72,128]{1,0:T(1,128)}', space=vmem, size = 0x9000, scoped, tag = 'internal scratch']
  #allocation2 [shape = 'f32[64,128]{1,0:T(8,128)}', space=vmem, size = 0x8000, scoped, tag = 'scratch operand']
  #allocation3 [shape = 'bf16[64,32]{1,0:T(8,128)(2,1)}', space=vmem, size = 0x4000, scoped, tag = 'scratch operand']
  %s0 = inlined_call_operand.vmem [shape: bf16[1,64,32], index: 0, kind: input, shape index: {}]
  %s1 = inlined_call_operand.vmem [shape: bf16[32,128], index: 1, kind: input, shape index: {}]
  %s2 = inlined_call_operand.vmem [shape: bf16[32,128], index: 2, kind: input, shape index: {}]
  %s3 = inlined_call_operand.vmem [shape: f32[1,128], index: 3, kind: input, shape index: {}]
  %s4 = inlined_call_operand.vmem [shape: bf16[32,128], index: 4, kind: input, shape index: {}]
  %s5 = inlined_call_operand.vmem [shape: bf16[32,128], index: 5, kind: input, shape index: {}]
  %s6 = inlined_call_operand.vmem [shape: f32[1,128], index: 6, kind: input, shape index: {}]
  %s7 = inlined_call_operand.vmem [shape: bf16[32,32], index: 7, kind: input, shape index: {}]
  %s8 = inlined_call_operand.vmem [shape: bf16[32,32], index: 8, kind: input, shape index: {}]
  %s9 = inlined_call_operand.vmem [shape: f32[1,32], index: 9, kind: input, shape index: {}]
  %s10 = inlined_call_operand.vmem [shape: bf16[32,8], index: 10, kind: input, shape index: {}]
  %s11 = inlined_call_operand.vmem [shape: f32[1,8], index: 11, kind: input, shape index: {}]
  %s12 = inlined_call_operand.vmem [shape: f32[8,8], index: 12, kind: output, shape index: {}]
  %s13 = sld [smem:[#allocation0]]
  $region58: #{recurrent_classifier_forward.1} parent=0
    _
  %s15 = ssub.s32 1, %s13
  %s16 = scalar_select 0, %s15, %s13
  // Predicated region
  $region2: #{recurrent_classifier_forward.1} parent=0 // pred_check
    _
  $region3: #{recurrent_classifier_forward.1} parent=0 // pred_check_branch
    %18 = sbr.rel (0) target = $region5
  $region4: #{recurrent_classifier_forward.1} parent=0 // pred_region
    _
  $region5: #{recurrent_classifier_forward.1} parent=0 // pred_fallthru
    _
  // Predicated region
  $region6: #{recurrent_classifier_forward.1} parent=0 // pred_check
    _
  $region7: #{recurrent_classifier_forward.1} parent=0 // pred_check_branch
    %20 = sbr.rel (0) target = $region9
  $region8: #{recurrent_classifier_forward.1} parent=0 // pred_region
    _
  $region9: #{recurrent_classifier_forward.1} parent=0 // pred_fallthru
    _
  // Predicated region
  $region10: #{recurrent_classifier_forward.1} parent=0 // pred_check
    _
  $region11: #{recurrent_classifier_forward.1} parent=0 // pred_check_branch
    %22 = sbr.rel (0) target = $region13
  $region12: #{recurrent_classifier_forward.1} parent=0 // pred_region
    _
  $region13: #{recurrent_classifier_forward.1} parent=0 // pred_fallthru
    _
  // Predicated region
  $region14: #{recurrent_classifier_forward.1} parent=0 // pred_check
    _
  $region15: #{recurrent_classifier_forward.1} parent=0 // pred_check_branch
    %24 = sbr.rel (0) target = $region17
  $region16: #{recurrent_classifier_forward.1} parent=0 // pred_region
    _
  $region17: #{recurrent_classifier_forward.1} parent=0 // pred_fallthru
    _
  // Predicated region
  $region18: #{recurrent_classifier_forward.1} parent=0 // pred_check
    _
  $region19: #{recurrent_classifier_forward.1} parent=0 // pred_check_branch
    %26 = sbr.rel (0) target = $region21
  $region20: #{recurrent_classifier_forward.1} parent=0 // pred_region
    _
  $region21: #{recurrent_classifier_forward.1} parent=0 // pred_fallthru
    _
  // Predicated region
  $region22: #{recurrent_classifier_forward.1} parent=0 // pred_check
    _
  $region23: #{recurrent_classifier_forward.1} parent=0 // pred_check_branch
    %28 = sbr.rel (0) target = $region25
  $region24: #{recurrent_classifier_forward.1} parent=0 // pred_region
    _
  $region25: #{recurrent_classifier_forward.1} parent=0 // pred_fallthru
    _
  // Predicated region
  $region26: #{recurrent_classifier_forward.1} parent=0 // pred_check
    _
  $region27: #{recurrent_classifier_forward.1} parent=0 // pred_check_branch
    %30 = sbr.rel (0) target = $region29
  $region28: #{recurrent_classifier_forward.1} parent=0 // pred_region
    _
  $region29: #{recurrent_classifier_forward.1} parent=0 // pred_fallthru
    _
  // Predicated region
  $region30: #{recurrent_classifier_forward.1} parent=0 // pred_check
    _
  $region31: #{recurrent_classifier_forward.1} parent=0 // pred_check_branch
    %32 = sbr.rel (0) target = $region33
  $region32: #{recurrent_classifier_forward.1} parent=0 // pred_region
    _
  $region33: #{recurrent_classifier_forward.1} parent=0 // pred_fallthru
    _
  // Predicated region
  $region34: #{recurrent_classifier_forward.1} parent=0 // pred_check
    _
  $region35: #{recurrent_classifier_forward.1} parent=0 // pred_check_branch
    %34 = sbr.rel (0) target = $region37
  $region36: #{recurrent_classifier_forward.1} parent=0 // pred_region
    _
  $region37: #{recurrent_classifier_forward.1} parent=0 // pred_fallthru
    _
  // Predicated region
  $region38: #{recurrent_classifier_forward.1} parent=0 // pred_check
    _
  $region39: #{recurrent_classifier_forward.1} parent=0 // pred_check_branch
    %36 = sbr.rel (0) target = $region41
  $region40: #{recurrent_classifier_forward.1} parent=0 // pred_region
    _
  $region41: #{recurrent_classifier_forward.1} parent=0 // pred_fallthru
    _
  // Predicated region
  $region42: #{recurrent_classifier_forward.1} parent=0 // pred_check
    _
  $region43: #{recurrent_classifier_forward.1} parent=0 // pred_check_branch
    %38 = sbr.rel (0) target = $region45
  $region44: #{recurrent_classifier_forward.1} parent=0 // pred_region
    _
  $region45: #{recurrent_classifier_forward.1} parent=0 // pred_fallthru
    _
  // Predicated region
  $region46: #{recurrent_classifier_forward.1} parent=0 // pred_check
    _
  $region47: #{recurrent_classifier_forward.1} parent=0 // pred_check_branch
    %40 = sbr.rel (0) target = $region49
  $region48: #{recurrent_classifier_forward.1} parent=0 // pred_region
    _
  $region49: #{recurrent_classifier_forward.1} parent=0 // pred_fallthru
    _
  %v42 = vld [vmem:[%s0] sm:$0xf]
  %v43 = vld [vmem:[%s0 + $0x4] sm:$0xf]
  %v44 = vld [vmem:[%s0 + $0x8] sm:$0xf]
  %v45 = vld [vmem:[%s0 + $0xc] sm:$0xf]
  %v46 = vld [vmem:[%s0 + $0x10] sm:$0xf]
  %v47 = vld [vmem:[%s0 + $0x14] sm:$0xf]
  %v48 = vld [vmem:[%s0 + $0x18] sm:$0xf]
  %v49 = vld [vmem:[%s0 + $0x1c] sm:$0xf]
  %v50 = vld [vmem:[%s1] sm:$0xf]
  %v51 = vld [vmem:[%s1 + $0x4] sm:$0xf]
  %v52 = vld [vmem:[%s1 + $0x8] sm:$0xf]
  %v53 = vld [vmem:[%s1 + $0xc] sm:$0xf]
  %v54 = vld [vmem:[%s3] sm:$0x1]
  %v56 = vperm.slane %v54, 0
  %v66 = vunpack.c.l.b16 %v42
  %v67 = vunpack.c.l.b16 %v43
  %v68 = vunpack.c.l.b16 %v44
  %v69 = vunpack.c.l.b16 %v45
  %v70 = vunpack.c.l.b16 %v46
  %v71 = vunpack.c.l.b16 %v47
  %v72 = vunpack.c.l.b16 %v48
  %v73 = vunpack.c.l.b16 %v49
  %v74 = vpack.c.b16 %v67, %v66
  %v75 = vpack.c.b16 %v69, %v68
  %v76 = vpack.c.b16 %v71, %v70
  %v77 = vpack.c.b16 %v73, %v72
  %v82 = vunpack.c.l.b16 %v50
  %v83 = vunpack.c.l.b16 %v51
  %v84 = vunpack.c.l.b16 %v52
  %v85 = vunpack.c.l.b16 %v53
  %v86 = vpack.c.b16 %v83, %v82
  %v87 = vpack.c.b16 %v85, %v84
  %vm90 = vcmask 261120
  %v92 = vsel %vm90, %v74, 0
  %v95 = vsel %vm90, %v75, 0
  %v98 = vsel %vm90, %v76, 0
  %v101 = vsel %vm90, %v77, 0
  %103 = vmatpush.bf16.msra.mxu0 0
  %104 = vmatpush.bf16.msra.mxu0 0
  %105 = vmatpush.bf16.msra.mxu0 0
  %106 = vmatpush.bf16.msra.mxu0 0
  %107 = vmatpush.bf16.msra.mxu0 0
  %108 = vmatpush.bf16.msra.mxu0 0
  %109 = vmatpush.bf16.msra.mxu0 %v87
  %110 = vmatpush.bf16.msra.mxu0 %v86
  %111 = vmatmul.bf16.gmra.mxu0 %v92
  %v112 = vpop.f32.mrf.mxu0
  %v113 = vadd.f32 %v56, %v112
  %v114 = vpop.f32.mrf.mxu0
  %v115 = vadd.f32 %v56, %v114
  %116 = vmatmul.bf16.gmra.mxu0 %v95
  %v117 = vpop.f32.mrf.mxu0
  %v118 = vadd.f32 %v56, %v117
  %v119 = vpop.f32.mrf.mxu0
  %v120 = vadd.f32 %v56, %v119
  %121 = vmatmul.bf16.gmra.mxu0 %v98
  %v122 = vpop.f32.mrf.mxu0
  %v123 = vadd.f32 %v56, %v122
  %v124 = vpop.f32.mrf.mxu0
  %v125 = vadd.f32 %v56, %v124
  %126 = vmatmul.bf16.gmra.mxu0 %v101
  %v127 = vpop.f32.mrf.mxu0
  %v128 = vadd.f32 %v56, %v127
  %v129 = vpop.f32.mrf.mxu0
  %v130 = vadd.f32 %v56, %v129
  %131 = vdwg.mxu0
  %132 = vst [vmem:[#allocation2] sm:$0xff] %v113
  %133 = vst [vmem:[#allocation2 + $0x8] sm:$0xff] %v115
  %134 = vst [vmem:[#allocation2 + $0x10] sm:$0xff] %v118
  %135 = vst [vmem:[#allocation2 + $0x18] sm:$0xff] %v120
  %136 = vst [vmem:[#allocation2 + $0x20] sm:$0xff] %v123
  %137 = vst [vmem:[#allocation2 + $0x28] sm:$0xff] %v125
  %138 = vst [vmem:[#allocation2 + $0x30] sm:$0xff] %v128
  %139 = vst [vmem:[#allocation2 + $0x38] sm:$0xff] %v130
  %v140 = vld [vmem:[%s2] sm:$0xf]
  %v141 = vld [vmem:[%s2 + $0x4] sm:$0xf]
  %v142 = vld [vmem:[%s2 + $0x8] sm:$0xf]
  %v143 = vld [vmem:[%s2 + $0xc] sm:$0xf]
  %v144 = vld [vmem:[#allocation2] sm:$0xff]
  %v149 = vunpack.c.l.b16 %v140
  %v150 = vunpack.c.l.b16 %v141
  %v151 = vunpack.c.l.b16 %v142
  %v152 = vunpack.c.l.b16 %v143
  %v153 = vpack.c.b16 %v150, %v149
  %v154 = vpack.c.b16 %v152, %v151
  %v158 = vsel %vm90, 0, 0
  %160 = vmatpush.bf16.msra.mxu0 0
  %161 = vmatpush.bf16.msra.mxu0 0
  %162 = vmatpush.bf16.msra.mxu0 0
  %163 = vmatpush.bf16.msra.mxu0 0
  %164 = vmatpush.bf16.msra.mxu0 0
  %165 = vmatpush.bf16.msra.mxu0 0
  %166 = vmatpush.bf16.msra.mxu0 %v154
  %167 = vmatpush.bf16.msra.mxu0 %v153
  %168 = vmatmul.bf16.gmra.mxu0 %v158
  %v169 = vpop.f32.mrf.mxu0
  %v170 = vadd.f32 0.0, %v169
  %v171 = vpop.f32.mrf.mxu0
  %172 = vdwg.mxu0
  %v173 = vadd.f32 %v144, %v170
  %v174 = vtanh.pop %v173
  %v175 = vmul.f32 %v174, 0.5
  %v176 = vadd.f32 %v175, 0.5
  %v177 = vmul.f32 %v176, 0.0
  %179 = vrot.lane.b32.xlu0 %v174, 64
  %v180 = vpop.permute.xlu0 %179
  %v182 = vmul.f32 %v176, %v180
  %184 = vrot.lane.b32.xlu0 %v182, 32
  %v185 = vpop.permute.xlu0 %184
  %v187 = vadd.f32 %v177, %v185
  %v188 = vtanh.pop %v187
  %190 = vrot.lane.b32.xlu0 %v188, 64
  %v191 = vpop.permute.xlu0 %190
  %v193 = vmul.f32 %v176, %v191
  %v194 = vpack.c.bf16 %v193, %v193
  %196 = vrot.lane.b32.xlu0 %v194, 32
  %v197 = vpop.permute.xlu0 %196
  %vm199 = vcmask 257024
  %200 = vst.msk [vmem:[#allocation3] sm:$0xf] %vm199, %v197
  %v201 = vld [vmem:[#allocation2 + $0x8] sm:$0xff]
  %v202 = vunpack.c.l.b16 %v194
  %v203 = vpack.c.b16 %v202, %v202
  %204 = vrot.lane.b32.xlu0 %v203, 32
  %v205 = vpop.permute.xlu0 %204
  %v207 = vsel %vm90, %v205, 0
  %209 = vmatpush.bf16.msra.mxu0 0
  %210 = vmatpush.bf16.msra.mxu0 0
  %211 = vmatpush.bf16.msra.mxu0 0
  %212 = vmatpush.bf16.msra.mxu0 0
  %213 = vmatpush.bf16.msra.mxu0 0
  %214 = vmatpush.bf16.msra.mxu0 0
  %215 = vmatpush.bf16.msra.mxu0 %v154
  %216 = vmatpush.bf16.msra.mxu0 %v153
  %217 = vmatmul.bf16.gmra.mxu0 %v207
  %v218 = vpop.f32.mrf.mxu0
  %v219 = vadd.f32 0.0, %v218
  %v220 = vpop.f32.mrf.mxu0
  %221 = vdwg.mxu0
  %v222 = vadd.f32 %v201, %v219
  %v223 = vtanh.pop %v222
  %v224 = vmul.f32 %v223, 0.5
  %v225 = vadd.f32 %v224, 0.5
  %v226 = vmul.f32 %v225, %v187
  %228 = vrot.lane.b32.xlu0 %v223, 64
  %v229 = vpop.permute.xlu0 %228
  %v231 = vmul.f32 %v225, %v229
  %233 = vrot.lane.b32.xlu0 %v231, 32
  %v234 = vpop.permute.xlu0 %233
  %v236 = vadd.f32 %v226, %v234
  %v237 = vtanh.pop %v236
  %239 = vrot.lane.b32.xlu0 %v237, 64
  %v240 = vpop.permute.xlu0 %239
  %v242 = vmul.f32 %v225, %v240
  %v243 = vpack.c.bf16 %v242, %v242
  %245 = vrot.lane.b32.xlu0 %v243, 32
  %v246 = vpop.permute.xlu0 %245
  %248 = vst.msk [vmem:[#allocation3 + $0x4] sm:$0xf] %vm199, %v246
  %v249 = vld [vmem:[#allocation2 + $0x10] sm:$0xff]
  %v250 = vunpack.c.l.b16 %v243
  %v251 = vpack.c.b16 %v250, %v250
  %252 = vrot.lane.b32.xlu0 %v251, 32
  %v253 = vpop.permute.xlu0 %252
  %v255 = vsel %vm90, %v253, 0
  %257 = vmatpush.bf16.msra.mxu0 0
  %258 = vmatpush.bf16.msra.mxu0 0
  %259 = vmatpush.bf16.msra.mxu0 0
  %260 = vmatpush.bf16.msra.mxu0 0
  %261 = vmatpush.bf16.msra.mxu0 0
  %262 = vmatpush.bf16.msra.mxu0 0
  %263 = vmatpush.bf16.msra.mxu0 %v154
  %264 = vmatpush.bf16.msra.mxu0 %v153
  %265 = vmatmul.bf16.gmra.mxu0 %v255
  %v266 = vpop.f32.mrf.mxu0
  %v267 = vadd.f32 0.0, %v266
  %v268 = vpop.f32.mrf.mxu0
  %269 = vdwg.mxu0
  %v270 = vadd.f32 %v249, %v267
  %v271 = vtanh.pop %v270
  %v272 = vmul.f32 %v271, 0.5
  %v273 = vadd.f32 %v272, 0.5
  %v274 = vmul.f32 %v273, %v236
  %276 = vrot.lane.b32.xlu0 %v271, 64
  %v277 = vpop.permute.xlu0 %276
  %v279 = vmul.f32 %v273, %v277
  %281 = vrot.lane.b32.xlu0 %v279, 32
  %v282 = vpop.permute.xlu0 %281
  %v284 = vadd.f32 %v274, %v282
  %v285 = vtanh.pop %v284
  %287 = vrot.lane.b32.xlu0 %v285, 64
  %v288 = vpop.permute.xlu0 %287
  %v290 = vmul.f32 %v273, %v288
  %v291 = vpack.c.bf16 %v290, %v290
  %293 = vrot.lane.b32.xlu0 %v291, 32
  %v294 = vpop.permute.xlu0 %293
  %296 = vst.msk [vmem:[#allocation3 + $0x8] sm:$0xf] %vm199, %v294
  %v297 = vld [vmem:[#allocation2 + $0x18] sm:$0xff]
  %v298 = vunpack.c.l.b16 %v291
  %v299 = vpack.c.b16 %v298, %v298
  %300 = vrot.lane.b32.xlu0 %v299, 32
  %v301 = vpop.permute.xlu0 %300
  %v303 = vsel %vm90, %v301, 0
  %305 = vmatpush.bf16.msra.mxu0 0
  %306 = vmatpush.bf16.msra.mxu0 0
  %307 = vmatpush.bf16.msra.mxu0 0
  %308 = vmatpush.bf16.msra.mxu0 0
  %309 = vmatpush.bf16.msra.mxu0 0
  %310 = vmatpush.bf16.msra.mxu0 0
  %311 = vmatpush.bf16.msra.mxu0 %v154
  %312 = vmatpush.bf16.msra.mxu0 %v153
  %313 = vmatmul.bf16.gmra.mxu0 %v303
  %v314 = vpop.f32.mrf.mxu0
  %v315 = vadd.f32 0.0, %v314
  %v316 = vpop.f32.mrf.mxu0
  %317 = vdwg.mxu0
  %v318 = vadd.f32 %v297, %v315
  %v319 = vtanh.pop %v318
  %v320 = vmul.f32 %v319, 0.5
  %v321 = vadd.f32 %v320, 0.5
  %v322 = vmul.f32 %v321, %v284
  %324 = vrot.lane.b32.xlu0 %v319, 64
  %v325 = vpop.permute.xlu0 %324
  %v327 = vmul.f32 %v321, %v325
  %329 = vrot.lane.b32.xlu0 %v327, 32
  %v330 = vpop.permute.xlu0 %329
  %v332 = vadd.f32 %v322, %v330
  %v333 = vtanh.pop %v332
  %335 = vrot.lane.b32.xlu0 %v333, 64
  %v336 = vpop.permute.xlu0 %335
  %v338 = vmul.f32 %v321, %v336
  %v339 = vpack.c.bf16 %v338, %v338
  %341 = vrot.lane.b32.xlu0 %v339, 32
  %v342 = vpop.permute.xlu0 %341
  %344 = vst.msk [vmem:[#allocation3 + $0xc] sm:$0xf] %vm199, %v342
  %v345 = vld [vmem:[#allocation2 + $0x20] sm:$0xff]
  %v346 = vunpack.c.l.b16 %v339
  %v347 = vpack.c.b16 %v346, %v346
  %348 = vrot.lane.b32.xlu0 %v347, 32
  %v349 = vpop.permute.xlu0 %348
  %v351 = vsel %vm90, %v349, 0
  %353 = vmatpush.bf16.msra.mxu0 0
  %354 = vmatpush.bf16.msra.mxu0 0
  %355 = vmatpush.bf16.msra.mxu0 0
  %356 = vmatpush.bf16.msra.mxu0 0
  %357 = vmatpush.bf16.msra.mxu0 0
  %358 = vmatpush.bf16.msra.mxu0 0
  %359 = vmatpush.bf16.msra.mxu0 %v154
  %360 = vmatpush.bf16.msra.mxu0 %v153
  %361 = vmatmul.bf16.gmra.mxu0 %v351
  %v362 = vpop.f32.mrf.mxu0
  %v363 = vadd.f32 0.0, %v362
  %v364 = vpop.f32.mrf.mxu0
  %365 = vdwg.mxu0
  %v366 = vadd.f32 %v345, %v363
  %v367 = vtanh.pop %v366
  %v368 = vmul.f32 %v367, 0.5
  %v369 = vadd.f32 %v368, 0.5
  %v370 = vmul.f32 %v369, %v332
  %372 = vrot.lane.b32.xlu0 %v367, 64
  %v373 = vpop.permute.xlu0 %372
  %v375 = vmul.f32 %v369, %v373
  %377 = vrot.lane.b32.xlu0 %v375, 32
  %v378 = vpop.permute.xlu0 %377
  %v380 = vadd.f32 %v370, %v378
  %v381 = vtanh.pop %v380
  %383 = vrot.lane.b32.xlu0 %v381, 64
  %v384 = vpop.permute.xlu0 %383
  %v386 = vmul.f32 %v369, %v384
  %v387 = vpack.c.bf16 %v386, %v386
  %389 = vrot.lane.b32.xlu0 %v387, 32
  %v390 = vpop.permute.xlu0 %389
  %392 = vst.msk [vmem:[#allocation3 + $0x10] sm:$0xf] %vm199, %v390
  %v393 = vld [vmem:[#allocation2 + $0x28] sm:$0xff]
  %v394 = vunpack.c.l.b16 %v387
  %v395 = vpack.c.b16 %v394, %v394
  %396 = vrot.lane.b32.xlu0 %v395, 32
  %v397 = vpop.permute.xlu0 %396
  %v399 = vsel %vm90, %v397, 0
  %401 = vmatpush.bf16.msra.mxu0 0
  %402 = vmatpush.bf16.msra.mxu0 0
  %403 = vmatpush.bf16.msra.mxu0 0
  %404 = vmatpush.bf16.msra.mxu0 0
  %405 = vmatpush.bf16.msra.mxu0 0
  %406 = vmatpush.bf16.msra.mxu0 0
  %407 = vmatpush.bf16.msra.mxu0 %v154
  %408 = vmatpush.bf16.msra.mxu0 %v153
  %409 = vmatmul.bf16.gmra.mxu0 %v399
  %v410 = vpop.f32.mrf.mxu0
  %v411 = vadd.f32 0.0, %v410
  %v412 = vpop.f32.mrf.mxu0
  %413 = vdwg.mxu0
  %v414 = vadd.f32 %v393, %v411
  %v415 = vtanh.pop %v414
  %v416 = vmul.f32 %v415, 0.5
  %v417 = vadd.f32 %v416, 0.5
  %v418 = vmul.f32 %v417, %v380
  %420 = vrot.lane.b32.xlu0 %v415, 64
  %v421 = vpop.permute.xlu0 %420
  %v423 = vmul.f32 %v417, %v421
  %425 = vrot.lane.b32.xlu0 %v423, 32
  %v426 = vpop.permute.xlu0 %425
  %v428 = vadd.f32 %v418, %v426
  %v429 = vtanh.pop %v428
  %431 = vrot.lane.b32.xlu0 %v429, 64
  %v432 = vpop.permute.xlu0 %431
  %v434 = vmul.f32 %v417, %v432
  %v435 = vpack.c.bf16 %v434, %v434
  %437 = vrot.lane.b32.xlu0 %v435, 32
  %v438 = vpop.permute.xlu0 %437
  %440 = vst.msk [vmem:[#allocation3 + $0x14] sm:$0xf] %vm199, %v438
  %v441 = vld [vmem:[#allocation2 + $0x30] sm:$0xff]
  %v442 = vunpack.c.l.b16 %v435
  %v443 = vpack.c.b16 %v442, %v442
  %444 = vrot.lane.b32.xlu0 %v443, 32
  %v445 = vpop.permute.xlu0 %444
  %v447 = vsel %vm90, %v445, 0
  %449 = vmatpush.bf16.msra.mxu0 0
  %450 = vmatpush.bf16.msra.mxu0 0
  %451 = vmatpush.bf16.msra.mxu0 0
  %452 = vmatpush.bf16.msra.mxu0 0
  %453 = vmatpush.bf16.msra.mxu0 0
  %454 = vmatpush.bf16.msra.mxu0 0
  %455 = vmatpush.bf16.msra.mxu0 %v154
  %456 = vmatpush.bf16.msra.mxu0 %v153
  %457 = vmatmul.bf16.gmra.mxu0 %v447
  %v458 = vpop.f32.mrf.mxu0
  %v459 = vadd.f32 0.0, %v458
  %v460 = vpop.f32.mrf.mxu0
  %461 = vdwg.mxu0
  %v462 = vadd.f32 %v441, %v459
  %v463 = vtanh.pop %v462
  %v464 = vmul.f32 %v463, 0.5
  %v465 = vadd.f32 %v464, 0.5
  %v466 = vmul.f32 %v465, %v428
  %468 = vrot.lane.b32.xlu0 %v463, 64
  %v469 = vpop.permute.xlu0 %468
  %v471 = vmul.f32 %v465, %v469
  %473 = vrot.lane.b32.xlu0 %v471, 32
  %v474 = vpop.permute.xlu0 %473
  %v476 = vadd.f32 %v466, %v474
  %v477 = vtanh.pop %v476
  %479 = vrot.lane.b32.xlu0 %v477, 64
  %v480 = vpop.permute.xlu0 %479
  %v482 = vmul.f32 %v465, %v480
  %v483 = vpack.c.bf16 %v482, %v482
  %485 = vrot.lane.b32.xlu0 %v483, 32
  %v486 = vpop.permute.xlu0 %485
  %488 = vst.msk [vmem:[#allocation3 + $0x18] sm:$0xf] %vm199, %v486
  %v489 = vld [vmem:[#allocation2 + $0x38] sm:$0xff]
  %v490 = vunpack.c.l.b16 %v483
  %v491 = vpack.c.b16 %v490, %v490
  %492 = vrot.lane.b32.xlu0 %v491, 32
  %v493 = vpop.permute.xlu0 %492
  %v495 = vsel %vm90, %v493, 0
  %497 = vmatpush.bf16.msra.mxu0 0
  %498 = vmatpush.bf16.msra.mxu0 0
  %499 = vmatpush.bf16.msra.mxu0 0
  %500 = vmatpush.bf16.msra.mxu0 0
  %501 = vmatpush.bf16.msra.mxu0 0
  %502 = vmatpush.bf16.msra.mxu0 0
  %503 = vmatpush.bf16.msra.mxu0 %v154
  %504 = vmatpush.bf16.msra.mxu0 %v153
  %505 = vmatmul.bf16.gmra.mxu0 %v495
  %v506 = vpop.f32.mrf.mxu0
  %v507 = vadd.f32 0.0, %v506
  %v508 = vpop.f32.mrf.mxu0
  %509 = vdwg.mxu0
  %v510 = vadd.f32 %v489, %v507
  %v511 = vtanh.pop %v510
  %v512 = vmul.f32 %v511, 0.5
  %v513 = vadd.f32 %v512, 0.5
  %v514 = vmul.f32 %v513, %v476
  %516 = vrot.lane.b32.xlu0 %v511, 64
  %v517 = vpop.permute.xlu0 %516
  %v519 = vmul.f32 %v513, %v517
  %521 = vrot.lane.b32.xlu0 %v519, 32
  %v522 = vpop.permute.xlu0 %521
  %v524 = vadd.f32 %v514, %v522
  %v525 = vtanh.pop %v524
  %527 = vrot.lane.b32.xlu0 %v525, 64
  %v528 = vpop.permute.xlu0 %527
  %v530 = vmul.f32 %v513, %v528
  %v531 = vpack.c.bf16 %v530, %v530
  %533 = vrot.lane.b32.xlu0 %v531, 32
  %v534 = vpop.permute.xlu0 %533
  %536 = vst.msk [vmem:[#allocation3 + $0x1c] sm:$0xf] %vm199, %v534
  %v537 = vld [vmem:[#allocation3] sm:$0xf]
  %v538 = vld [vmem:[#allocation3 + $0x4] sm:$0xf]
  %v539 = vld [vmem:[#allocation3 + $0x8] sm:$0xf]
  %v540 = vld [vmem:[#allocation3 + $0xc] sm:$0xf]
  %v541 = vld [vmem:[#allocation3 + $0x10] sm:$0xf]
  %v542 = vld [vmem:[#allocation3 + $0x14] sm:$0xf]
  %v543 = vld [vmem:[#allocation3 + $0x18] sm:$0xf]
  %v544 = vld [vmem:[#allocation3 + $0x1c] sm:$0xf]
  %v545 = vld [vmem:[%s4] sm:$0xf]
  %v546 = vld [vmem:[%s4 + $0x4] sm:$0xf]
  %v547 = vld [vmem:[%s4 + $0x8] sm:$0xf]
  %v548 = vld [vmem:[%s4 + $0xc] sm:$0xf]
  %v549 = vld [vmem:[%s6] sm:$0x1]
  %v551 = vperm.slane %v549, 0
  %v561 = vunpack.c.l.b16 %v537
  %v562 = vunpack.c.l.b16 %v538
  %v563 = vunpack.c.l.b16 %v539
  %v564 = vunpack.c.l.b16 %v540
  %v565 = vunpack.c.l.b16 %v541
  %v566 = vunpack.c.l.b16 %v542
  %v567 = vunpack.c.l.b16 %v543
  %v568 = vunpack.c.l.b16 %v544
  %v569 = vpack.c.b16 %v562, %v561
  %v570 = vpack.c.b16 %v564, %v563
  %v571 = vpack.c.b16 %v566, %v565
  %v572 = vpack.c.b16 %v568, %v567
  %v577 = vunpack.c.l.b16 %v545
  %v578 = vunpack.c.l.b16 %v546
  %v579 = vunpack.c.l.b16 %v547
  %v580 = vunpack.c.l.b16 %v548
  %v581 = vpack.c.b16 %v578, %v577
  %v582 = vpack.c.b16 %v580, %v579
  %v586 = vsel %vm90, %v569, 0
  %v589 = vsel %vm90, %v570, 0
  %v592 = vsel %vm90, %v571, 0
  %v595 = vsel %vm90, %v572, 0
  %597 = vmatpush.bf16.msra.mxu0 0
  %598 = vmatpush.bf16.msra.mxu0 0
  %599 = vmatpush.bf16.msra.mxu0 0
  %600 = vmatpush.bf16.msra.mxu0 0
  %601 = vmatpush.bf16.msra.mxu0 0
  %602 = vmatpush.bf16.msra.mxu0 0
  %603 = vmatpush.bf16.msra.mxu0 %v582
  %604 = vmatpush.bf16.msra.mxu0 %v581
  %605 = vmatmul.bf16.gmra.mxu0 %v586
  %v606 = vpop.f32.mrf.mxu0
  %v607 = vadd.f32 %v551, %v606
  %v608 = vpop.f32.mrf.mxu0
  %v609 = vadd.f32 %v551, %v608
  %610 = vmatmul.bf16.gmra.mxu0 %v589
  %v611 = vpop.f32.mrf.mxu0
  %v612 = vadd.f32 %v551, %v611
  %v613 = vpop.f32.mrf.mxu0
  %v614 = vadd.f32 %v551, %v613
  %615 = vmatmul.bf16.gmra.mxu0 %v592
  %v616 = vpop.f32.mrf.mxu0
  %v617 = vadd.f32 %v551, %v616
  %v618 = vpop.f32.mrf.mxu0
  %v619 = vadd.f32 %v551, %v618
  %620 = vmatmul.bf16.gmra.mxu0 %v595
  %v621 = vpop.f32.mrf.mxu0
  %v622 = vadd.f32 %v551, %v621
  %v623 = vpop.f32.mrf.mxu0
  %v624 = vadd.f32 %v551, %v623
  %625 = vdwg.mxu0
  %626 = vst [vmem:[#allocation2] sm:$0xff] %v607
  %627 = vst [vmem:[#allocation2 + $0x8] sm:$0xff] %v609
  %628 = vst [vmem:[#allocation2 + $0x10] sm:$0xff] %v612
  %629 = vst [vmem:[#allocation2 + $0x18] sm:$0xff] %v614
  %630 = vst [vmem:[#allocation2 + $0x20] sm:$0xff] %v617
  %631 = vst [vmem:[#allocation2 + $0x28] sm:$0xff] %v619
  %632 = vst [vmem:[#allocation2 + $0x30] sm:$0xff] %v622
  %633 = vst [vmem:[#allocation2 + $0x38] sm:$0xff] %v624
  %v634 = vld [vmem:[%s5] sm:$0xf]
  %v635 = vld [vmem:[%s5 + $0x4] sm:$0xf]
  %v636 = vld [vmem:[%s5 + $0x8] sm:$0xf]
  %v637 = vld [vmem:[%s5 + $0xc] sm:$0xf]
  %v638 = vld [vmem:[#allocation2] sm:$0xff]
  %v643 = vunpack.c.l.b16 %v634
  %v644 = vunpack.c.l.b16 %v635
  %v645 = vunpack.c.l.b16 %v636
  %v646 = vunpack.c.l.b16 %v637
  %v647 = vpack.c.b16 %v644, %v643
  %v648 = vpack.c.b16 %v646, %v645
  %651 = vmatpush.bf16.msra.mxu0 0
  %652 = vmatpush.bf16.msra.mxu0 0
  %653 = vmatpush.bf16.msra.mxu0 0
  %654 = vmatpush.bf16.msra.mxu0 0
  %655 = vmatpush.bf16.msra.mxu0 0
  %656 = vmatpush.bf16.msra.mxu0 0
  %657 = vmatpush.bf16.msra.mxu0 %v648
  %658 = vmatpush.bf16.msra.mxu0 %v647
  %659 = vmatmul.bf16.gmra.mxu0 %v158
  %v660 = vpop.f32.mrf.mxu0
  %v661 = vadd.f32 0.0, %v660
  %v662 = vpop.f32.mrf.mxu0
  %663 = vdwg.mxu0
  %v664 = vadd.f32 %v638, %v661
  %v665 = vtanh.pop %v664
  %v666 = vmul.f32 %v665, 0.5
  %v667 = vadd.f32 %v666, 0.5
  %v668 = vmul.f32 %v667, 0.0
  %670 = vrot.lane.b32.xlu0 %v665, 64
  %v671 = vpop.permute.xlu0 %670
  %v673 = vmul.f32 %v667, %v671
  %675 = vrot.lane.b32.xlu0 %v673, 32
  %v676 = vpop.permute.xlu0 %675
  %v678 = vadd.f32 %v668, %v676
  %v679 = vtanh.pop %v678
  %681 = vrot.lane.b32.xlu0 %v679, 64
  %v682 = vpop.permute.xlu0 %681
  %v684 = vmul.f32 %v667, %v682
  %v685 = vpack.c.bf16 %v684, %v684
  %v686 = vld [vmem:[#allocation2 + $0x8] sm:$0xff]
  %688 = vrot.lane.b32.xlu0 %v685, 32
  %v689 = vpop.permute.xlu0 %688
  %v691 = vsel %vm90, %v689, 0
  %693 = vmatpush.bf16.msra.mxu0 0
  %694 = vmatpush.bf16.msra.mxu0 0
  %695 = vmatpush.bf16.msra.mxu0 0
  %696 = vmatpush.bf16.msra.mxu0 0
  %697 = vmatpush.bf16.msra.mxu0 0
  %698 = vmatpush.bf16.msra.mxu0 0
  %699 = vmatpush.bf16.msra.mxu0 %v648
  %700 = vmatpush.bf16.msra.mxu0 %v647
  %701 = vmatmul.bf16.gmra.mxu0 %v691
  %v702 = vpop.f32.mrf.mxu0
  %v703 = vadd.f32 0.0, %v702
  %v704 = vpop.f32.mrf.mxu0
  %705 = vdwg.mxu0
  %v706 = vadd.f32 %v686, %v703
  %v707 = vtanh.pop %v706
  %v708 = vmul.f32 %v707, 0.5
  %v709 = vadd.f32 %v708, 0.5
  %v710 = vmul.f32 %v709, %v678
  %712 = vrot.lane.b32.xlu0 %v707, 64
  %v713 = vpop.permute.xlu0 %712
  %v715 = vmul.f32 %v709, %v713
  %717 = vrot.lane.b32.xlu0 %v715, 32
  %v718 = vpop.permute.xlu0 %717
  %v720 = vadd.f32 %v710, %v718
  %v721 = vtanh.pop %v720
  %723 = vrot.lane.b32.xlu0 %v721, 64
  %v724 = vpop.permute.xlu0 %723
  %v726 = vmul.f32 %v709, %v724
  %v727 = vpack.c.bf16 %v726, %v726
  %v728 = vld [vmem:[#allocation2 + $0x10] sm:$0xff]
  %730 = vrot.lane.b32.xlu0 %v727, 32
  %v731 = vpop.permute.xlu0 %730
  %v733 = vsel %vm90, %v731, 0
  %735 = vmatpush.bf16.msra.mxu0 0
  %736 = vmatpush.bf16.msra.mxu0 0
  %737 = vmatpush.bf16.msra.mxu0 0
  %738 = vmatpush.bf16.msra.mxu0 0
  %739 = vmatpush.bf16.msra.mxu0 0
  %740 = vmatpush.bf16.msra.mxu0 0
  %741 = vmatpush.bf16.msra.mxu0 %v648
  %742 = vmatpush.bf16.msra.mxu0 %v647
  %743 = vmatmul.bf16.gmra.mxu0 %v733
  %v744 = vpop.f32.mrf.mxu0
  %v745 = vadd.f32 0.0, %v744
  %v746 = vpop.f32.mrf.mxu0
  %747 = vdwg.mxu0
  %v748 = vadd.f32 %v728, %v745
  %v749 = vtanh.pop %v748
  %v750 = vmul.f32 %v749, 0.5
  %v751 = vadd.f32 %v750, 0.5
  %v752 = vmul.f32 %v751, %v720
  %754 = vrot.lane.b32.xlu0 %v749, 64
  %v755 = vpop.permute.xlu0 %754
  %v757 = vmul.f32 %v751, %v755
  %759 = vrot.lane.b32.xlu0 %v757, 32
  %v760 = vpop.permute.xlu0 %759
  %v762 = vadd.f32 %v752, %v760
  %v763 = vtanh.pop %v762
  %765 = vrot.lane.b32.xlu0 %v763, 64
  %v766 = vpop.permute.xlu0 %765
  %v768 = vmul.f32 %v751, %v766
  %v769 = vpack.c.bf16 %v768, %v768
  %v770 = vld [vmem:[#allocation2 + $0x18] sm:$0xff]
  %772 = vrot.lane.b32.xlu0 %v769, 32
  %v773 = vpop.permute.xlu0 %772
  %v775 = vsel %vm90, %v773, 0
  %777 = vmatpush.bf16.msra.mxu0 0
  %778 = vmatpush.bf16.msra.mxu0 0
  %779 = vmatpush.bf16.msra.mxu0 0
  %780 = vmatpush.bf16.msra.mxu0 0
  %781 = vmatpush.bf16.msra.mxu0 0
  %782 = vmatpush.bf16.msra.mxu0 0
  %783 = vmatpush.bf16.msra.mxu0 %v648
  %784 = vmatpush.bf16.msra.mxu0 %v647
  %785 = vmatmul.bf16.gmra.mxu0 %v775
  %v786 = vpop.f32.mrf.mxu0
  %v787 = vadd.f32 0.0, %v786
  %v788 = vpop.f32.mrf.mxu0
  %789 = vdwg.mxu0
  %v790 = vadd.f32 %v770, %v787
  %v791 = vtanh.pop %v790
  %v792 = vmul.f32 %v791, 0.5
  %v793 = vadd.f32 %v792, 0.5
  %v794 = vmul.f32 %v793, %v762
  %796 = vrot.lane.b32.xlu0 %v791, 64
  %v797 = vpop.permute.xlu0 %796
  %v799 = vmul.f32 %v793, %v797
  %801 = vrot.lane.b32.xlu0 %v799, 32
  %v802 = vpop.permute.xlu0 %801
  %v804 = vadd.f32 %v794, %v802
  %v805 = vtanh.pop %v804
  %807 = vrot.lane.b32.xlu0 %v805, 64
  %v808 = vpop.permute.xlu0 %807
  %v810 = vmul.f32 %v793, %v808
  %v811 = vpack.c.bf16 %v810, %v810
  %v812 = vld [vmem:[#allocation2 + $0x20] sm:$0xff]
  %814 = vrot.lane.b32.xlu0 %v811, 32
  %v815 = vpop.permute.xlu0 %814
  %v817 = vsel %vm90, %v815, 0
  %819 = vmatpush.bf16.msra.mxu0 0
  %820 = vmatpush.bf16.msra.mxu0 0
  %821 = vmatpush.bf16.msra.mxu0 0
  %822 = vmatpush.bf16.msra.mxu0 0
  %823 = vmatpush.bf16.msra.mxu0 0
  %824 = vmatpush.bf16.msra.mxu0 0
  %825 = vmatpush.bf16.msra.mxu0 %v648
  %826 = vmatpush.bf16.msra.mxu0 %v647
  %827 = vmatmul.bf16.gmra.mxu0 %v817
  %v828 = vpop.f32.mrf.mxu0
  %v829 = vadd.f32 0.0, %v828
  %v830 = vpop.f32.mrf.mxu0
  %831 = vdwg.mxu0
  %v832 = vadd.f32 %v812, %v829
  %v833 = vtanh.pop %v832
  %v834 = vmul.f32 %v833, 0.5
  %v835 = vadd.f32 %v834, 0.5
  %v836 = vmul.f32 %v835, %v804
  %838 = vrot.lane.b32.xlu0 %v833, 64
  %v839 = vpop.permute.xlu0 %838
  %v841 = vmul.f32 %v835, %v839
  %843 = vrot.lane.b32.xlu0 %v841, 32
  %v844 = vpop.permute.xlu0 %843
  %v846 = vadd.f32 %v836, %v844
  %v847 = vtanh.pop %v846
  %849 = vrot.lane.b32.xlu0 %v847, 64
  %v850 = vpop.permute.xlu0 %849
  %v852 = vmul.f32 %v835, %v850
  %v853 = vpack.c.bf16 %v852, %v852
  %v854 = vld [vmem:[#allocation2 + $0x28] sm:$0xff]
  %856 = vrot.lane.b32.xlu0 %v853, 32
  %v857 = vpop.permute.xlu0 %856
  %v859 = vsel %vm90, %v857, 0
  %861 = vmatpush.bf16.msra.mxu0 0
  %862 = vmatpush.bf16.msra.mxu0 0
  %863 = vmatpush.bf16.msra.mxu0 0
  %864 = vmatpush.bf16.msra.mxu0 0
  %865 = vmatpush.bf16.msra.mxu0 0
  %866 = vmatpush.bf16.msra.mxu0 0
  %867 = vmatpush.bf16.msra.mxu0 %v648
  %868 = vmatpush.bf16.msra.mxu0 %v647
  %869 = vmatmul.bf16.gmra.mxu0 %v859
  %v870 = vpop.f32.mrf.mxu0
  %v871 = vadd.f32 0.0, %v870
  %v872 = vpop.f32.mrf.mxu0
  %873 = vdwg.mxu0
  %v874 = vadd.f32 %v854, %v871
  %v875 = vtanh.pop %v874
  %v876 = vmul.f32 %v875, 0.5
  %v877 = vadd.f32 %v876, 0.5
  %v878 = vmul.f32 %v877, %v846
  %880 = vrot.lane.b32.xlu0 %v875, 64
  %v881 = vpop.permute.xlu0 %880
  %v883 = vmul.f32 %v877, %v881
  %885 = vrot.lane.b32.xlu0 %v883, 32
  %v886 = vpop.permute.xlu0 %885
  %v888 = vadd.f32 %v878, %v886
  %v889 = vtanh.pop %v888
  %891 = vrot.lane.b32.xlu0 %v889, 64
  %v892 = vpop.permute.xlu0 %891
  %v894 = vmul.f32 %v877, %v892
  %v895 = vpack.c.bf16 %v894, %v894
  %v896 = vld [vmem:[#allocation2 + $0x30] sm:$0xff]
  %898 = vrot.lane.b32.xlu0 %v895, 32
  %v899 = vpop.permute.xlu0 %898
  %v901 = vsel %vm90, %v899, 0
  %903 = vmatpush.bf16.msra.mxu0 0
  %904 = vmatpush.bf16.msra.mxu0 0
  %905 = vmatpush.bf16.msra.mxu0 0
  %906 = vmatpush.bf16.msra.mxu0 0
  %907 = vmatpush.bf16.msra.mxu0 0
  %908 = vmatpush.bf16.msra.mxu0 0
  %909 = vmatpush.bf16.msra.mxu0 %v648
  %910 = vmatpush.bf16.msra.mxu0 %v647
  %911 = vmatmul.bf16.gmra.mxu0 %v901
  %v912 = vpop.f32.mrf.mxu0
  %v913 = vadd.f32 0.0, %v912
  %v914 = vpop.f32.mrf.mxu0
  %915 = vdwg.mxu0
  %v916 = vadd.f32 %v896, %v913
  %v917 = vtanh.pop %v916
  %v918 = vmul.f32 %v917, 0.5
  %v919 = vadd.f32 %v918, 0.5
  %v920 = vmul.f32 %v919, %v888
  %922 = vrot.lane.b32.xlu0 %v917, 64
  %v923 = vpop.permute.xlu0 %922
  %v925 = vmul.f32 %v919, %v923
  %927 = vrot.lane.b32.xlu0 %v925, 32
  %v928 = vpop.permute.xlu0 %927
  %v930 = vadd.f32 %v920, %v928
  %v931 = vtanh.pop %v930
  %933 = vrot.lane.b32.xlu0 %v931, 64
  %v934 = vpop.permute.xlu0 %933
  %v936 = vmul.f32 %v919, %v934
  %v937 = vpack.c.bf16 %v936, %v936
  %v938 = vld [vmem:[#allocation2 + $0x38] sm:$0xff]
  %940 = vrot.lane.b32.xlu0 %v937, 32
  %v941 = vpop.permute.xlu0 %940
  %v943 = vsel %vm90, %v941, 0
  %945 = vmatpush.bf16.msra.mxu0 0
  %946 = vmatpush.bf16.msra.mxu0 0
  %947 = vmatpush.bf16.msra.mxu0 0
  %948 = vmatpush.bf16.msra.mxu0 0
  %949 = vmatpush.bf16.msra.mxu0 0
  %950 = vmatpush.bf16.msra.mxu0 0
  %951 = vmatpush.bf16.msra.mxu0 %v648
  %952 = vmatpush.bf16.msra.mxu0 %v647
  %953 = vmatmul.bf16.gmra.mxu0 %v943
  %v954 = vpop.f32.mrf.mxu0
  %v955 = vadd.f32 0.0, %v954
  %v956 = vpop.f32.mrf.mxu0
  %957 = vdwg.mxu0
  %v958 = vadd.f32 %v938, %v955
  %v959 = vtanh.pop %v958
  %v960 = vmul.f32 %v959, 0.5
  %v961 = vadd.f32 %v960, 0.5
  %v962 = vmul.f32 %v961, %v930
  %964 = vrot.lane.b32.xlu0 %v959, 64
  %v965 = vpop.permute.xlu0 %964
  %v967 = vmul.f32 %v961, %v965
  %969 = vrot.lane.b32.xlu0 %v967, 32
  %v970 = vpop.permute.xlu0 %969
  %v972 = vadd.f32 %v962, %v970
  %v973 = vtanh.pop %v972
  %975 = vrot.lane.b32.xlu0 %v973, 64
  %v976 = vpop.permute.xlu0 %975
  %v978 = vmul.f32 %v961, %v976
  %v979 = vpack.c.bf16 %v978, %v978
  %v980 = vld [vmem:[%s7] sm:$0xf]
  %v981 = vld [vmem:[%s7 + $0x4] sm:$0xf]
  %v982 = vld [vmem:[%s7 + $0x8] sm:$0xf]
  %v983 = vld [vmem:[%s7 + $0xc] sm:$0xf]
  %v984 = vld [vmem:[%s8] sm:$0xf]
  %v985 = vld [vmem:[%s8 + $0x4] sm:$0xf]
  %v986 = vld [vmem:[%s8 + $0x8] sm:$0xf]
  %v987 = vld [vmem:[%s8 + $0xc] sm:$0xf]
  %989 = vrot.lane.b32.xlu0 %v979, 32
  %v990 = vpop.permute.xlu0 %989
  %v995 = vunpack.c.l.b16 %v984
  %v996 = vunpack.c.l.b16 %v985
  %v997 = vunpack.c.l.b16 %v986
  %v998 = vunpack.c.l.b16 %v987
  %v999 = vpack.c.b16 %v996, %v995
  %v1000 = vpack.c.b16 %v998, %v997
  %v1004 = vsel %vm90, %v990, 0
  %1006 = vmatpush.bf16.msra.mxu0 0
  %1007 = vmatpush.bf16.msra.mxu0 0
  %1008 = vmatpush.bf16.msra.mxu0 0
  %1009 = vmatpush.bf16.msra.mxu0 0
  %1010 = vmatpush.bf16.msra.mxu0 0
  %1011 = vmatpush.bf16.msra.mxu0 0
  %1012 = vmatpush.bf16.msra.mxu0 %v1000
  %1013 = vmatpush.bf16.msra.mxu0 %v999
  %1014 = vmatmul.bf16.gmra.mxu0 %v1004
  %v1015 = vpop.f32.mrf.mxu0
  %v1016 = vadd.f32 0.0, %v1015
  %v1017 = vpop.f32.mrf.mxu0
  %1018 = vdwg.mxu0
  %v1019 = vunpack.c.l.b16 %v531
  %v1020 = vpack.c.b16 %v1019, %v1019
  %1021 = vrot.lane.b32.xlu0 %v1020, 32
  %v1022 = vpop.permute.xlu0 %1021
  %v1027 = vunpack.c.l.b16 %v980
  %v1028 = vunpack.c.l.b16 %v981
  %v1029 = vunpack.c.l.b16 %v982
  %v1030 = vunpack.c.l.b16 %v983
  %v1031 = vpack.c.b16 %v1028, %v1027
  %v1032 = vpack.c.b16 %v1030, %v1029
  %v1036 = vsel %vm90, %v1022, 0
  %1038 = vmatpush.bf16.msra.mxu0 0
  %1039 = vmatpush.bf16.msra.mxu0 0
  %1040 = vmatpush.bf16.msra.mxu0 0
  %1041 = vmatpush.bf16.msra.mxu0 0
  %1042 = vmatpush.bf16.msra.mxu0 0
  %1043 = vmatpush.bf16.msra.mxu0 0
  %1044 = vmatpush.bf16.msra.mxu0 %v1032
  %1045 = vmatpush.bf16.msra.mxu0 %v1031
  %1046 = vmatmul.bf16.gmra.mxu0 %v1036
  %v1047 = vpop.f32.mrf.mxu0
  %v1048 = vadd.f32 %v1016, %v1047
  %v1049 = vpop.f32.mrf.mxu0
  %1050 = vdwg.mxu0
  %v1051 = vld [vmem:[%s9] sm:$0x1]
  %v1053 = vperm.slane %v1051, 0
  %v1055 = vadd.f32 %v1048, %v1053
  %v1056 = vpack.c.bf16 %v1055, %v1055
  %v1057 = vld [vmem:[%s10] sm:$0xf]
  %v1058 = vld [vmem:[%s10 + $0x4] sm:$0xf]
  %v1059 = vld [vmem:[%s10 + $0x8] sm:$0xf]
  %v1060 = vld [vmem:[%s10 + $0xc] sm:$0xf]
  %v1061 = vld [vmem:[%s11] sm:$0x1]
  %v1063 = vperm.slane %v1061, 0
  %v1069 = vunpack.c.l.b16 %v1057
  %v1070 = vunpack.c.l.b16 %v1058
  %v1071 = vunpack.c.l.b16 %v1059
  %v1072 = vunpack.c.l.b16 %v1060
  %v1073 = vpack.c.b16 %v1070, %v1069
  %v1074 = vpack.c.b16 %v1072, %v1071
  %v1078 = vsel %vm90, %v1056, 0
  %1080 = vmatpush.bf16.msra.mxu0 0
  %1081 = vmatpush.bf16.msra.mxu0 0
  %1082 = vmatpush.bf16.msra.mxu0 0
  %1083 = vmatpush.bf16.msra.mxu0 0
  %1084 = vmatpush.bf16.msra.mxu0 0
  %1085 = vmatpush.bf16.msra.mxu0 0
  %1086 = vmatpush.bf16.msra.mxu0 %v1074
  %1087 = vmatpush.bf16.msra.mxu0 %v1073
  %1088 = vmatmul.bf16.gmra.mxu0 %v1078
  %v1089 = vpop.f32.mrf.mxu0
  %v1090 = vadd.f32 %v1063, %v1089
  %v1091 = vpop.f32.mrf.mxu0
  %1092 = vdwg.mxu0
  %vm1093 = vcmask 64512
  %1094 = vst.msk [vmem:[%s12] sm:$0xff] %vm1093, %v1090
  // Predicated region
  $region50: #{recurrent_classifier_forward.1} parent=0 // pred_check
    _
  $region51: #{recurrent_classifier_forward.1} parent=0 // pred_check_branch
    %1096 = sbr.rel (0) target = $region53
  $region52: #{recurrent_classifier_forward.1} parent=0 // pred_region
    _
  $region53: #{recurrent_classifier_forward.1} parent=0 // pred_fallthru
    _
  // Predicated region
  $region54: #{recurrent_classifier_forward.1} parent=0 // pred_check
    _
  $region55: #{recurrent_classifier_forward.1} parent=0 // pred_check_branch
    %1098 = sbr.rel (0) target = $region57
  $region56: #{recurrent_classifier_forward.1} parent=0 // pred_region
    _
  $region57: #{recurrent_classifier_forward.1} parent=0 // pred_fallthru
    _

</llo_original>
